<compile_context>
chip_gen: v6e
topology: v6e:2x2x1
jax: 0.10.0
libtpu: 0.0.40
codegen_flags: <defaults>
</compile_context>

<pallas_src>
import jax
import jax.numpy as jnp
import numpy as np
from jax.experimental import pallas as pl
from jax.experimental.pallas import tpu as pltpu


def _make_kernel(heads, dim_head, eps):
    def kernel(xq_ref, xk_ref, xv_ref, g_ref, b_ref,
               wq_ref, wk_ref, wv_ref, wo_ref, bo_ref,
               o_ref, ctx_scratch):
        mxu_dtype = wq_ref.dtype                 # f32 or bf16 (chosen by wrapper)
        gamma = g_ref[...]                       # (1, D)
        beta = b_ref[...]                        # (1, D)

        def layer_norm(x):                       # (N, D) f32, torch.nn.LayerNorm semantics
            mean = jnp.mean(x, axis=-1, keepdims=True)
            xc = x - mean
            var = jnp.mean(xc * xc, axis=-1, keepdims=True)
            return xc * jax.lax.rsqrt(var + eps) * gamma + beta

        xq = layer_norm(xq_ref[0])
        xk = layer_norm(xk_ref[0])
        xv = layer_norm(xv_ref[0])

        # Head-fused projections: (N, D) @ (D, inner) -> (N, inner); f32 accumulation.
        # Softmax scale is already folded into Wq by the wrapper.
        q = jnp.dot(xq.astype(mxu_dtype), wq_ref[...], preferred_element_type=jnp.float32)
        k = jnp.dot(xk.astype(mxu_dtype), wk_ref[...], preferred_element_type=jnp.float32)
        v = jnp.dot(xv.astype(mxu_dtype), wv_ref[...], preferred_element_type=jnp.float32)

        # Per-head attention; heads is small, static Python unroll.
        for h in range(heads):
            lo = h * dim_head
            q_h = q[:, lo:lo + dim_head].astype(mxu_dtype)
            k_h = k[:, lo:lo + dim_head].astype(mxu_dtype)
            v_h = v[:, lo:lo + dim_head].astype(mxu_dtype)

            # q_h @ k_h^T without materializing a transpose (contract last dims).
            dots = jax.lax.dot_general(
                q_h, k_h, (((1,), (1,)), ((), ())),
                preferred_element_type=jnp.float32)                      # (N, N)
            dots = dots - jnp.max(dots, axis=-1, keepdims=True)
            e = jnp.exp(dots)
            attn = e * pl.reciprocal(jnp.sum(e, axis=-1, keepdims=True), approx=True)

            ctx_scratch[:, lo:lo + dim_head] = jnp.dot(
                attn.astype(mxu_dtype), v_h, preferred_element_type=jnp.float32)

        # Single lane-dense output projection: (N, inner) @ (inner, D) + bias, one store.
        out = jnp.dot(ctx_scratch[...].astype(mxu_dtype), wo_ref[...],
                      preferred_element_type=jnp.float32)
        o_ref[0] = (out + bo_ref[...]).astype(o_ref.dtype)

    return kernel


def prenorm_attn_pallas(x, y, z, gamma, beta, wq, wk, wv, wo, bo, *,
                        heads, dim_head, eps=1e-5, mxu_dtype=jnp.float32):
    """x/y/z: (B, N, D) f32. gamma/beta: (D,) LayerNorm affine (shared across x/y/z).
    wq/wk/wv: (inner_dim, D), wo: (D, inner_dim), bo: (D,)  (PyTorch Linear layout).
    mxu_dtype: jnp.float32 or jnp.bfloat16 (matmul operand dtype; accumulation stays f32)."""
    B, N, D = x.shape
    inner = heads * dim_head
    assert wq.shape == (inner, D) and wo.shape == (D, inner)
    scale = dim_head ** (-0.5)

    # Wrapper-side layout plumbing (free): pre-transpose all weights so the kernel never
    # runs an XLU transpose, fold the softmax scale into Wq, pre-cast MXU operands.
    wq_t = (wq.T * scale).astype(mxu_dtype)          # (D, inner)
    wk_t = wk.T.astype(mxu_dtype)                    # (D, inner)
    wv_t = wv.T.astype(mxu_dtype)                    # (D, inner)
    wo_t = wo.T.astype(mxu_dtype)                    # (inner, D)
    gamma2 = gamma.reshape(1, D).astype(jnp.float32)
    beta2 = beta.reshape(1, D).astype(jnp.float32)
    bo2 = bo.reshape(1, D).astype(jnp.float32)

    seq_spec = pl.BlockSpec((1, N, D), lambda b: (b, 0, 0))
    vec_spec = pl.BlockSpec((1, D), lambda b: (0, 0))
    wqkv_spec = pl.BlockSpec((D, inner), lambda b: (0, 0))
    wo_spec = pl.BlockSpec((inner, D), lambda b: (0, 0))
    out_spec = pl.BlockSpec((1, N, D), lambda b: (b, 0, 0))

    return pl.pallas_call(
        _make_kernel(heads, dim_head, eps),
        out_shape=jax.ShapeDtypeStruct((B, N, D), jnp.float32),
        grid_spec=pltpu.PrefetchScalarGridSpec(
            num_scalar_prefetch=0,
            grid=(B,),                               # batch only; megacore-shardable
            in_specs=[seq_spec, seq_spec, seq_spec,  # x, y, z
                      vec_spec, vec_spec,            # LayerNorm gamma, beta
                      wqkv_spec, wqkv_spec, wqkv_spec,   # Wq^T*scale, Wk^T, Wv^T
                      wo_spec,                       # Wo^T
                      vec_spec],                     # output bias
            out_specs=out_spec,
            scratch_shapes=[pltpu.VMEM((N, inner), jnp.float32)]),
        compiler_params=pltpu.CompilerParams(
            dimension_semantics=("parallel",)),
    )(x, y, z, gamma2, beta2, wq_t, wk_t, wv_t, wo_t, bo2)


def prenorm_attn_reference(x, y, z, gamma, beta, wq, wk, wv, wo, bo, *,
                           heads, dim_head, eps=1e-5):
    """Plain-JAX mirror of the PyTorch forward (mask=None, dropout=0)."""
    def ln(t):
        mean = t.mean(-1, keepdims=True)
        var = ((t - mean) ** 2).mean(-1, keepdims=True)
        return (t - mean) / jnp.sqrt(var + eps) * gamma + beta

    xq, xk, xv = ln(x), ln(y), ln(z)
    B, N, D = x.shape
    scale = dim_head ** (-0.5)
    q = xq @ wq.T
    k = xk @ wk.T
    v = xv @ wv.T

    def split(t):  # b n (h d) -> b h n d
        return t.reshape(B, N, heads, dim_head).transpose(0, 2, 1, 3)

    q, k, v = split(q), split(k), split(v)
    dots = jnp.einsum('bhid,bhjd->bhij', q, k) * scale
    attn = jax.nn.softmax(dots, axis=-1)
    out = jnp.einsum('bhij,bhjd->bhid', attn, v)
    out = out.transpose(0, 2, 1, 3).reshape(B, N, heads * dim_head)
    return out @ wo.T + bo


if __name__ == "__main__":
    # Small deterministic config: dim=32, heads=4, dim_head=16 -> inner_dim=64
    B, N, D = 2, 8, 32
    HEADS, DIM_HEAD = 4, 16
    INNER = HEADS * DIM_HEAD

    key = jax.random.PRNGKey(0)
    ks = jax.random.split(key, 10)
    x = jax.random.normal(ks[0], (B, N, D), dtype=jnp.float32)
    y = jax.random.normal(ks[1], (B, N, D), dtype=jnp.float32)
    z = jax.random.normal(ks[2], (B, N, D), dtype=jnp.float32)

    # LayerNorm affine (shared module applied to x, y, z) + Attention params (torch layout).
    gamma = 1.0 + 0.1 * jax.random.normal(ks[3], (D,), dtype=jnp.float32)
    beta = 0.1 * jax.random.normal(ks[4], (D,), dtype=jnp.float32)
    wq = jax.random.normal(ks[5], (INNER, D), dtype=jnp.float32) * 0.1
    wk = jax.random.normal(ks[6], (INNER, D), dtype=jnp.float32) * 0.1
    wv = jax.random.normal(ks[7], (INNER, D), dtype=jnp.float32) * 0.1
    wo = jax.random.normal(ks[8], (D, INNER), dtype=jnp.float32) * 0.1
    bo = jax.random.normal(ks[9], (D,), dtype=jnp.float32) * 0.1

    ref = prenorm_attn_reference(x, y, z, gamma, beta, wq, wk, wv, wo, bo,
                                 heads=HEADS, dim_head=DIM_HEAD)

    # f32 MXU operands (v5e-friendly); tolerance covers the approx softmax reciprocal.
    out_f32 = prenorm_attn_pallas(x, y, z, gamma, beta, wq, wk, wv, wo, bo,
                                  heads=HEADS, dim_head=DIM_HEAD,
                                  mxu_dtype=jnp.float32)
    out_f32 = jax.block_until_ready(out_f32)
    np.testing.assert_allclose(np.asarray(out_f32), np.asarray(ref), rtol=1e-3, atol=1e-3)

    # bf16 MXU operands, f32 accumulation (v6e/v7x fast path).
    out_bf16 = prenorm_attn_pallas(x, y, z, gamma, beta, wq, wk, wv, wo, bo,
                                   heads=HEADS, dim_head=DIM_HEAD,
                                   mxu_dtype=jnp.bfloat16)
    out_bf16 = jax.block_until_ready(out_bf16)
    np.testing.assert_allclose(np.asarray(out_bf16), np.asarray(ref), rtol=3e-2, atol=3e-2)

    print("KERNEL_OK")
</pallas_src>

<mosaic_0001>
module attributes {stable_mosaic.version = 11 : i64} {
  func.func @kernel(%arg0: i32, %arg1: memref<1x8x32xf32, #tpu.memory_space<vmem>>, %arg2: memref<1x8x32xf32, #tpu.memory_space<vmem>>, %arg3: memref<1x8x32xf32, #tpu.memory_space<vmem>>, %arg4: memref<1x32xf32, #tpu.memory_space<vmem>>, %arg5: memref<1x32xf32, #tpu.memory_space<vmem>>, %arg6: memref<32x64xf32, #tpu.memory_space<vmem>>, %arg7: memref<32x64xf32, #tpu.memory_space<vmem>>, %arg8: memref<32x64xf32, #tpu.memory_space<vmem>>, %arg9: memref<64x32xf32, #tpu.memory_space<vmem>>, %arg10: memref<1x32xf32, #tpu.memory_space<vmem>>, %arg11: memref<1x8x32xf32, #tpu.memory_space<vmem>>, %arg12: memref<8x64xf32, #tpu.memory_space<vmem>>) attributes {dimension_semantics = [#tpu.dimension_semantics<parallel>], iteration_bounds = array<i64: 2>, scalar_prefetch = 0 : i64, scratch_operands = 1 : i64, tpu.core_type = #tpu.core_type<tc>, window_params = [{transform_indices = @transform_0, window_bounds = array<i64: 1, 8, 32>}, {transform_indices = @transform_1, window_bounds = array<i64: 1, 8, 32>}, {transform_indices = @transform_2, window_bounds = array<i64: 1, 8, 32>}, {pipeline_mode = #tpu.pipeline_mode<synchronous>, transform_indices = @transform_3, window_bounds = array<i64: 1, 32>}, {pipeline_mode = #tpu.pipeline_mode<synchronous>, transform_indices = @transform_4, window_bounds = array<i64: 1, 32>}, {pipeline_mode = #tpu.pipeline_mode<synchronous>, transform_indices = @transform_5, window_bounds = array<i64: 32, 64>}, {pipeline_mode = #tpu.pipeline_mode<synchronous>, transform_indices = @transform_6, window_bounds = array<i64: 32, 64>}, {pipeline_mode = #tpu.pipeline_mode<synchronous>, transform_indices = @transform_7, window_bounds = array<i64: 32, 64>}, {pipeline_mode = #tpu.pipeline_mode<synchronous>, transform_indices = @transform_8, window_bounds = array<i64: 64, 32>}, {pipeline_mode = #tpu.pipeline_mode<synchronous>, transform_indices = @transform_9, window_bounds = array<i64: 1, 32>}, {transform_indices = @transform_10, window_bounds = array<i64: 1, 8, 32>}]} {
    %c0 = arith.constant 0 : index
    %c0_0 = arith.constant 0 : index
    %0 = vector.load %arg4[%c0, %c0_0] : memref<1x32xf32, #tpu.memory_space<vmem>>, vector<1x32xf32>
    %c0_1 = arith.constant 0 : index
    %c0_2 = arith.constant 0 : index
    %1 = vector.load %arg5[%c0_1, %c0_2] : memref<1x32xf32, #tpu.memory_space<vmem>>, vector<1x32xf32>
    %c0_3 = arith.constant 0 : index
    %c0_4 = arith.constant 0 : index
    %c0_5 = arith.constant 0 : index
    %2 = vector.load %arg1[%c0_3, %c0_4, %c0_5] : memref<1x8x32xf32, #tpu.memory_space<vmem>>, vector<1x8x32xf32>
    %3 = vector.shape_cast %2 : vector<1x8x32xf32> to vector<8x32xf32>
    %cst = arith.constant dense<0.000000e+00> : vector<8xf32>
    %4 = vector.multi_reduction <add>, %3, %cst [1] : vector<8x32xf32> to vector<8xf32>
    %5 = vector.shape_cast %4 : vector<8xf32> to vector<8x1xf32>
    %cst_6 = arith.constant 3.200000e+01 : f32
    %6 = vector.broadcast %cst_6 : f32 to vector<8x1xf32>
    %7 = arith.divf %5, %6 : vector<8x1xf32>
    %8 = vector.broadcast %7 : vector<8x1xf32> to vector<8x32xf32>
    %9 = arith.subf %3, %8 : vector<8x32xf32>
    %10 = arith.mulf %9, %9 : vector<8x32xf32>
    %cst_7 = arith.constant dense<0.000000e+00> : vector<8xf32>
    %11 = vector.multi_reduction <add>, %10, %cst_7 [1] : vector<8x32xf32> to vector<8xf32>
    %12 = vector.shape_cast %11 : vector<8xf32> to vector<8x1xf32>
    %cst_8 = arith.constant 3.200000e+01 : f32
    %13 = vector.broadcast %cst_8 : f32 to vector<8x1xf32>
    %14 = arith.divf %12, %13 : vector<8x1xf32>
    %cst_9 = arith.constant 9.99999974E-6 : f32
    %15 = vector.broadcast %cst_9 : f32 to vector<8x1xf32>
    %16 = arith.addf %14, %15 : vector<8x1xf32>
    %17 = math.rsqrt %16 : vector<8x1xf32>
    %18 = vector.broadcast %17 : vector<8x1xf32> to vector<8x32xf32>
    %19 = arith.mulf %9, %18 : vector<8x32xf32>
    %20 = vector.broadcast %0 : vector<1x32xf32> to vector<8x32xf32>
    %21 = arith.mulf %19, %20 : vector<8x32xf32>
    %22 = vector.broadcast %1 : vector<1x32xf32> to vector<8x32xf32>
    %23 = arith.addf %21, %22 : vector<8x32xf32>
    %c0_10 = arith.constant 0 : index
    %c0_11 = arith.constant 0 : index
    %c0_12 = arith.constant 0 : index
    %24 = vector.load %arg2[%c0_10, %c0_11, %c0_12] : memref<1x8x32xf32, #tpu.memory_space<vmem>>, vector<1x8x32xf32>
    %25 = vector.shape_cast %24 : vector<1x8x32xf32> to vector<8x32xf32>
    %cst_13 = arith.constant dense<0.000000e+00> : vector<8xf32>
    %26 = vector.multi_reduction <add>, %25, %cst_13 [1] : vector<8x32xf32> to vector<8xf32>
    %27 = vector.shape_cast %26 : vector<8xf32> to vector<8x1xf32>
    %cst_14 = arith.constant 3.200000e+01 : f32
    %28 = vector.broadcast %cst_14 : f32 to vector<8x1xf32>
    %29 = arith.divf %27, %28 : vector<8x1xf32>
    %30 = vector.broadcast %29 : vector<8x1xf32> to vector<8x32xf32>
    %31 = arith.subf %25, %30 : vector<8x32xf32>
    %32 = arith.mulf %31, %31 : vector<8x32xf32>
    %cst_15 = arith.constant dense<0.000000e+00> : vector<8xf32>
    %33 = vector.multi_reduction <add>, %32, %cst_15 [1] : vector<8x32xf32> to vector<8xf32>
    %34 = vector.shape_cast %33 : vector<8xf32> to vector<8x1xf32>
    %cst_16 = arith.constant 3.200000e+01 : f32
    %35 = vector.broadcast %cst_16 : f32 to vector<8x1xf32>
    %36 = arith.divf %34, %35 : vector<8x1xf32>
    %cst_17 = arith.constant 9.99999974E-6 : f32
    %37 = vector.broadcast %cst_17 : f32 to vector<8x1xf32>
    %38 = arith.addf %36, %37 : vector<8x1xf32>
    %39 = math.rsqrt %38 : vector<8x1xf32>
    %40 = vector.broadcast %39 : vector<8x1xf32> to vector<8x32xf32>
    %41 = arith.mulf %31, %40 : vector<8x32xf32>
    %42 = vector.broadcast %0 : vector<1x32xf32> to vector<8x32xf32>
    %43 = arith.mulf %41, %42 : vector<8x32xf32>
    %44 = vector.broadcast %1 : vector<1x32xf32> to vector<8x32xf32>
    %45 = arith.addf %43, %44 : vector<8x32xf32>
    %c0_18 = arith.constant 0 : index
    %c0_19 = arith.constant 0 : index
    %c0_20 = arith.constant 0 : index
    %46 = vector.load %arg3[%c0_18, %c0_19, %c0_20] : memref<1x8x32xf32, #tpu.memory_space<vmem>>, vector<1x8x32xf32>
    %47 = vector.shape_cast %46 : vector<1x8x32xf32> to vector<8x32xf32>
    %cst_21 = arith.constant dense<0.000000e+00> : vector<8xf32>
    %48 = vector.multi_reduction <add>, %47, %cst_21 [1] : vector<8x32xf32> to vector<8xf32>
    %49 = vector.shape_cast %48 : vector<8xf32> to vector<8x1xf32>
    %cst_22 = arith.constant 3.200000e+01 : f32
    %50 = vector.broadcast %cst_22 : f32 to vector<8x1xf32>
    %51 = arith.divf %49, %50 : vector<8x1xf32>
    %52 = vector.broadcast %51 : vector<8x1xf32> to vector<8x32xf32>
    %53 = arith.subf %47, %52 : vector<8x32xf32>
    %54 = arith.mulf %53, %53 : vector<8x32xf32>
    %cst_23 = arith.constant dense<0.000000e+00> : vector<8xf32>
    %55 = vector.multi_reduction <add>, %54, %cst_23 [1] : vector<8x32xf32> to vector<8xf32>
    %56 = vector.shape_cast %55 : vector<8xf32> to vector<8x1xf32>
    %cst_24 = arith.constant 3.200000e+01 : f32
    %57 = vector.broadcast %cst_24 : f32 to vector<8x1xf32>
    %58 = arith.divf %56, %57 : vector<8x1xf32>
    %cst_25 = arith.constant 9.99999974E-6 : f32
    %59 = vector.broadcast %cst_25 : f32 to vector<8x1xf32>
    %60 = arith.addf %58, %59 : vector<8x1xf32>
    %61 = math.rsqrt %60 : vector<8x1xf32>
    %62 = vector.broadcast %61 : vector<8x1xf32> to vector<8x32xf32>
    %63 = arith.mulf %53, %62 : vector<8x32xf32>
    %64 = vector.broadcast %0 : vector<1x32xf32> to vector<8x32xf32>
    %65 = arith.mulf %63, %64 : vector<8x32xf32>
    %66 = vector.broadcast %1 : vector<1x32xf32> to vector<8x32xf32>
    %67 = arith.addf %65, %66 : vector<8x32xf32>
    %c0_26 = arith.constant 0 : index
    %c0_27 = arith.constant 0 : index
    %68 = vector.load %arg6[%c0_26, %c0_27] : memref<32x64xf32, #tpu.memory_space<vmem>>, vector<32x64xf32>
    %cst_28 = arith.constant dense<0.000000e+00> : vector<8x64xf32>
    %69 = tpu.matmul %23, %68, %cst_28 {dimension_numbers = #tpu.dot_dimension_numbers<[1], [0], [0], [1], [0, 0, 1, 1], [], []>} : vector<8x32xf32>, vector<32x64xf32>, vector<8x64xf32> -> vector<8x64xf32>
    %c0_29 = arith.constant 0 : index
    %c0_30 = arith.constant 0 : index
    %70 = vector.load %arg7[%c0_29, %c0_30] : memref<32x64xf32, #tpu.memory_space<vmem>>, vector<32x64xf32>
    %cst_31 = arith.constant dense<0.000000e+00> : vector<8x64xf32>
    %71 = tpu.matmul %45, %70, %cst_31 {dimension_numbers = #tpu.dot_dimension_numbers<[1], [0], [0], [1], [0, 0, 1, 1], [], []>} : vector<8x32xf32>, vector<32x64xf32>, vector<8x64xf32> -> vector<8x64xf32>
    %c0_32 = arith.constant 0 : index
    %c0_33 = arith.constant 0 : index
    %72 = vector.load %arg8[%c0_32, %c0_33] : memref<32x64xf32, #tpu.memory_space<vmem>>, vector<32x64xf32>
    %cst_34 = arith.constant dense<0.000000e+00> : vector<8x64xf32>
    %73 = tpu.matmul %67, %72, %cst_34 {dimension_numbers = #tpu.dot_dimension_numbers<[1], [0], [0], [1], [0, 0, 1, 1], [], []>} : vector<8x32xf32>, vector<32x64xf32>, vector<8x64xf32> -> vector<8x64xf32>
    %74 = vector.extract_strided_slice %69 {offsets = [0, 0], sizes = [8, 16], strides = [1, 1]} : vector<8x64xf32> to vector<8x16xf32>
    %75 = vector.extract_strided_slice %71 {offsets = [0, 0], sizes = [8, 16], strides = [1, 1]} : vector<8x64xf32> to vector<8x16xf32>
    %76 = vector.extract_strided_slice %73 {offsets = [0, 0], sizes = [8, 16], strides = [1, 1]} : vector<8x64xf32> to vector<8x16xf32>
    %cst_35 = arith.constant dense<0.000000e+00> : vector<8x8xf32>
    %77 = tpu.matmul %74, %75, %cst_35 {dimension_numbers = #tpu.dot_dimension_numbers<[1], [1], [0], [0], [0, 0, 1, 0], [], []>} : vector<8x16xf32>, vector<8x16xf32>, vector<8x8xf32> -> vector<8x8xf32>
    %cst_36 = arith.constant dense<0xFF800000> : vector<8xf32>
    %78 = vector.multi_reduction <maximumf>, %77, %cst_36 [1] : vector<8x8xf32> to vector<8xf32>
    %79 = vector.shape_cast %78 : vector<8xf32> to vector<8x1xf32>
    %80 = vector.broadcast %79 : vector<8x1xf32> to vector<8x8xf32>
    %81 = arith.subf %77, %80 : vector<8x8xf32>
    %82 = math.exp %81 : vector<8x8xf32>
    %cst_37 = arith.constant dense<0.000000e+00> : vector<8xf32>
    %83 = vector.multi_reduction <add>, %82, %cst_37 [1] : vector<8x8xf32> to vector<8xf32>
    %84 = vector.shape_cast %83 : vector<8xf32> to vector<8x1xf32>
    %85 = tpu.reciprocal %84 {approx = true} : vector<8x1xf32> -> vector<8x1xf32>
    %86 = vector.broadcast %85 : vector<8x1xf32> to vector<8x8xf32>
    %87 = arith.mulf %82, %86 : vector<8x8xf32>
    %cst_38 = arith.constant dense<0.000000e+00> : vector<8x16xf32>
    %88 = tpu.matmul %87, %76, %cst_38 {dimension_numbers = #tpu.dot_dimension_numbers<[1], [0], [0], [1], [0, 0, 1, 1], [], []>} : vector<8x8xf32>, vector<8x16xf32>, vector<8x16xf32> -> vector<8x16xf32>
    %c0_39 = arith.constant 0 : index
    %c0_40 = arith.constant 0 : index
    %89 = vector.load %arg12[%c0_39, %c0_40] : memref<8x64xf32, #tpu.memory_space<vmem>>, vector<8x16xf32>
    tpu.vector_store %arg12[%c0_39, %c0_40], %88 {strides = array<i32>} : memref<8x64xf32, #tpu.memory_space<vmem>>, vector<8x16xf32>,
    %90 = vector.extract_strided_slice %69 {offsets = [0, 16], sizes = [8, 16], strides = [1, 1]} : vector<8x64xf32> to vector<8x16xf32>
    %91 = vector.extract_strided_slice %71 {offsets = [0, 16], sizes = [8, 16], strides = [1, 1]} : vector<8x64xf32> to vector<8x16xf32>
    %92 = vector.extract_strided_slice %73 {offsets = [0, 16], sizes = [8, 16], strides = [1, 1]} : vector<8x64xf32> to vector<8x16xf32>
    %cst_41 = arith.constant dense<0.000000e+00> : vector<8x8xf32>
    %93 = tpu.matmul %90, %91, %cst_41 {dimension_numbers = #tpu.dot_dimension_numbers<[1], [1], [0], [0], [0, 0, 1, 0], [], []>} : vector<8x16xf32>, vector<8x16xf32>, vector<8x8xf32> -> vector<8x8xf32>
    %cst_42 = arith.constant dense<0xFF800000> : vector<8xf32>
    %94 = vector.multi_reduction <maximumf>, %93, %cst_42 [1] : vector<8x8xf32> to vector<8xf32>
    %95 = vector.shape_cast %94 : vector<8xf32> to vector<8x1xf32>
    %96 = vector.broadcast %95 : vector<8x1xf32> to vector<8x8xf32>
    %97 = arith.subf %93, %96 : vector<8x8xf32>
    %98 = math.exp %97 : vector<8x8xf32>
    %cst_43 = arith.constant dense<0.000000e+00> : vector<8xf32>
    %99 = vector.multi_reduction <add>, %98, %cst_43 [1] : vector<8x8xf32> to vector<8xf32>
    %100 = vector.shape_cast %99 : vector<8xf32> to vector<8x1xf32>
    %101 = tpu.reciprocal %100 {approx = true} : vector<8x1xf32> -> vector<8x1xf32>
    %102 = vector.broadcast %101 : vector<8x1xf32> to vector<8x8xf32>
    %103 = arith.mulf %98, %102 : vector<8x8xf32>
    %cst_44 = arith.constant dense<0.000000e+00> : vector<8x16xf32>
    %104 = tpu.matmul %103, %92, %cst_44 {dimension_numbers = #tpu.dot_dimension_numbers<[1], [0], [0], [1], [0, 0, 1, 1], [], []>} : vector<8x8xf32>, vector<8x16xf32>, vector<8x16xf32> -> vector<8x16xf32>
    %c0_45 = arith.constant 0 : index
    %c16 = arith.constant 16 : index
    %105 = vector.load %arg12[%c0_45, %c16] : memref<8x64xf32, #tpu.memory_space<vmem>>, vector<8x16xf32>
    tpu.vector_store %arg12[%c0_45, %c16], %104 {strides = array<i32>} : memref<8x64xf32, #tpu.memory_space<vmem>>, vector<8x16xf32>,
    %106 = vector.extract_strided_slice %69 {offsets = [0, 32], sizes = [8, 16], strides = [1, 1]} : vector<8x64xf32> to vector<8x16xf32>
    %107 = vector.extract_strided_slice %71 {offsets = [0, 32], sizes = [8, 16], strides = [1, 1]} : vector<8x64xf32> to vector<8x16xf32>
    %108 = vector.extract_strided_slice %73 {offsets = [0, 32], sizes = [8, 16], strides = [1, 1]} : vector<8x64xf32> to vector<8x16xf32>
    %cst_46 = arith.constant dense<0.000000e+00> : vector<8x8xf32>
    %109 = tpu.matmul %106, %107, %cst_46 {dimension_numbers = #tpu.dot_dimension_numbers<[1], [1], [0], [0], [0, 0, 1, 0], [], []>} : vector<8x16xf32>, vector<8x16xf32>, vector<8x8xf32> -> vector<8x8xf32>
    %cst_47 = arith.constant dense<0xFF800000> : vector<8xf32>
    %110 = vector.multi_reduction <maximumf>, %109, %cst_47 [1] : vector<8x8xf32> to vector<8xf32>
    %111 = vector.shape_cast %110 : vector<8xf32> to vector<8x1xf32>
    %112 = vector.broadcast %111 : vector<8x1xf32> to vector<8x8xf32>
    %113 = arith.subf %109, %112 : vector<8x8xf32>
    %114 = math.exp %113 : vector<8x8xf32>
    %cst_48 = arith.constant dense<0.000000e+00> : vector<8xf32>
    %115 = vector.multi_reduction <add>, %114, %cst_48 [1] : vector<8x8xf32> to vector<8xf32>
    %116 = vector.shape_cast %115 : vector<8xf32> to vector<8x1xf32>
    %117 = tpu.reciprocal %116 {approx = true} : vector<8x1xf32> -> vector<8x1xf32>
    %118 = vector.broadcast %117 : vector<8x1xf32> to vector<8x8xf32>
    %119 = arith.mulf %114, %118 : vector<8x8xf32>
    %cst_49 = arith.constant dense<0.000000e+00> : vector<8x16xf32>
    %120 = tpu.matmul %119, %108, %cst_49 {dimension_numbers = #tpu.dot_dimension_numbers<[1], [0], [0], [1], [0, 0, 1, 1], [], []>} : vector<8x8xf32>, vector<8x16xf32>, vector<8x16xf32> -> vector<8x16xf32>
    %c0_50 = arith.constant 0 : index
    %c32 = arith.constant 32 : index
    %121 = vector.load %arg12[%c0_50, %c32] : memref<8x64xf32, #tpu.memory_space<vmem>>, vector<8x16xf32>
    tpu.vector_store %arg12[%c0_50, %c32], %120 {strides = array<i32>} : memref<8x64xf32, #tpu.memory_space<vmem>>, vector<8x16xf32>,
    %122 = vector.extract_strided_slice %69 {offsets = [0, 48], sizes = [8, 16], strides = [1, 1]} : vector<8x64xf32> to vector<8x16xf32>
    %123 = vector.extract_strided_slice %71 {offsets = [0, 48], sizes = [8, 16], strides = [1, 1]} : vector<8x64xf32> to vector<8x16xf32>
    %124 = vector.extract_strided_slice %73 {offsets = [0, 48], sizes = [8, 16], strides = [1, 1]} : vector<8x64xf32> to vector<8x16xf32>
    %cst_51 = arith.constant dense<0.000000e+00> : vector<8x8xf32>
    %125 = tpu.matmul %122, %123, %cst_51 {dimension_numbers = #tpu.dot_dimension_numbers<[1], [1], [0], [0], [0, 0, 1, 0], [], []>} : vector<8x16xf32>, vector<8x16xf32>, vector<8x8xf32> -> vector<8x8xf32>
    %cst_52 = arith.constant dense<0xFF800000> : vector<8xf32>
    %126 = vector.multi_reduction <maximumf>, %125, %cst_52 [1] : vector<8x8xf32> to vector<8xf32>
    %127 = vector.shape_cast %126 : vector<8xf32> to vector<8x1xf32>
    %128 = vector.broadcast %127 : vector<8x1xf32> to vector<8x8xf32>
    %129 = arith.subf %125, %128 : vector<8x8xf32>
    %130 = math.exp %129 : vector<8x8xf32>
    %cst_53 = arith.constant dense<0.000000e+00> : vector<8xf32>
    %131 = vector.multi_reduction <add>, %130, %cst_53 [1] : vector<8x8xf32> to vector<8xf32>
    %132 = vector.shape_cast %131 : vector<8xf32> to vector<8x1xf32>
    %133 = tpu.reciprocal %132 {approx = true} : vector<8x1xf32> -> vector<8x1xf32>
    %134 = vector.broadcast %133 : vector<8x1xf32> to vector<8x8xf32>
    %135 = arith.mulf %130, %134 : vector<8x8xf32>
    %cst_54 = arith.constant dense<0.000000e+00> : vector<8x16xf32>
    %136 = tpu.matmul %135, %124, %cst_54 {dimension_numbers = #tpu.dot_dimension_numbers<[1], [0], [0], [1], [0, 0, 1, 1], [], []>} : vector<8x8xf32>, vector<8x16xf32>, vector<8x16xf32> -> vector<8x16xf32>
    %c0_55 = arith.constant 0 : index
    %c48 = arith.constant 48 : index
    %137 = vector.load %arg12[%c0_55, %c48] : memref<8x64xf32, #tpu.memory_space<vmem>>, vector<8x16xf32>
    tpu.vector_store %arg12[%c0_55, %c48], %136 {strides = array<i32>} : memref<8x64xf32, #tpu.memory_space<vmem>>, vector<8x16xf32>,
    %c0_56 = arith.constant 0 : index
    %c0_57 = arith.constant 0 : index
    %138 = vector.load %arg12[%c0_56, %c0_57] : memref<8x64xf32, #tpu.memory_space<vmem>>, vector<8x64xf32>
    %c0_58 = arith.constant 0 : index
    %c0_59 = arith.constant 0 : index
    %139 = vector.load %arg9[%c0_58, %c0_59] : memref<64x32xf32, #tpu.memory_space<vmem>>, vector<64x32xf32>
    %cst_60 = arith.constant dense<0.000000e+00> : vector<8x32xf32>
    %140 = tpu.matmul %138, %139, %cst_60 {dimension_numbers = #tpu.dot_dimension_numbers<[1], [0], [0], [1], [0, 0, 1, 1], [], []>} : vector<8x64xf32>, vector<64x32xf32>, vector<8x32xf32> -> vector<8x32xf32>
    %c0_61 = arith.constant 0 : index
    %c0_62 = arith.constant 0 : index
    %141 = vector.load %arg10[%c0_61, %c0_62] : memref<1x32xf32, #tpu.memory_space<vmem>>, vector<1x32xf32>
    %142 = vector.broadcast %141 : vector<1x32xf32> to vector<8x32xf32>
    %143 = arith.addf %140, %142 : vector<8x32xf32>
    %c0_63 = arith.constant 0 : index
    %c0_64 = arith.constant 0 : index
    %c0_65 = arith.constant 0 : index
    %144 = vector.load %arg11[%c0_63, %c0_64, %c0_65] : memref<1x8x32xf32, #tpu.memory_space<vmem>>, vector<1x8x32xf32>
    %145 = vector.shape_cast %144 : vector<1x8x32xf32> to vector<8x32xf32>
    %146 = vector.shape_cast %143 : vector<8x32xf32> to vector<1x8x32xf32>
    tpu.vector_store %arg11[%c0_63, %c0_64, %c0_65], %146 {strides = array<i32>} : memref<1x8x32xf32, #tpu.memory_space<vmem>>, vector<1x8x32xf32>,
    return
  }
  func.func @transform_0(%arg0: i32) -> (i32, i32, i32) {
    %c0_i32 = arith.constant 0 : i32
    %c0_i32_0 = arith.constant 0 : i32
    %c0_i32_1 = arith.constant 0 : i32
    return %arg0, %c0_i32, %c0_i32_0 : i32, i32, i32
  }
  func.func @transform_1(%arg0: i32) -> (i32, i32, i32) {
    %c0_i32 = arith.constant 0 : i32
    %c0_i32_0 = arith.constant 0 : i32
    %c0_i32_1 = arith.constant 0 : i32
    return %arg0, %c0_i32, %c0_i32_0 : i32, i32, i32
  }
  func.func @transform_2(%arg0: i32) -> (i32, i32, i32) {
    %c0_i32 = arith.constant 0 : i32
    %c0_i32_0 = arith.constant 0 : i32
    %c0_i32_1 = arith.constant 0 : i32
    return %arg0, %c0_i32, %c0_i32_0 : i32, i32, i32
  }
  func.func @transform_3(%arg0: i32) -> (i32, i32) {
    %c0_i32 = arith.constant 0 : i32
    %c0_i32_0 = arith.constant 0 : i32
    %c0_i32_1 = arith.constant 0 : i32
    return %c0_i32, %c0_i32_0 : i32, i32
  }
  func.func @transform_4(%arg0: i32) -> (i32, i32) {
    %c0_i32 = arith.constant 0 : i32
    %c0_i32_0 = arith.constant 0 : i32
    %c0_i32_1 = arith.constant 0 : i32
    return %c0_i32, %c0_i32_0 : i32, i32
  }
  func.func @transform_5(%arg0: i32) -> (i32, i32) {
    %c0_i32 = arith.constant 0 : i32
    %c0_i32_0 = arith.constant 0 : i32
    %c0_i32_1 = arith.constant 0 : i32
    return %c0_i32, %c0_i32_0 : i32, i32
  }
  func.func @transform_6(%arg0: i32) -> (i32, i32) {
    %c0_i32 = arith.constant 0 : i32
    %c0_i32_0 = arith.constant 0 : i32
    %c0_i32_1 = arith.constant 0 : i32
    return %c0_i32, %c0_i32_0 : i32, i32
  }
  func.func @transform_7(%arg0: i32) -> (i32, i32) {
    %c0_i32 = arith.constant 0 : i32
    %c0_i32_0 = arith.constant 0 : i32
    %c0_i32_1 = arith.constant 0 : i32
    return %c0_i32, %c0_i32_0 : i32, i32
  }
  func.func @transform_8(%arg0: i32) -> (i32, i32) {
    %c0_i32 = arith.constant 0 : i32
    %c0_i32_0 = arith.constant 0 : i32
    %c0_i32_1 = arith.constant 0 : i32
    return %c0_i32, %c0_i32_0 : i32, i32
  }
  func.func @transform_9(%arg0: i32) -> (i32, i32) {
    %c0_i32 = arith.constant 0 : i32
    %c0_i32_0 = arith.constant 0 : i32
    %c0_i32_1 = arith.constant 0 : i32
    return %c0_i32, %c0_i32_0 : i32, i32
  }
  func.func @transform_10(%arg0: i32) -> (i32, i32, i32) {
    %c0_i32 = arith.constant 0 : i32
    %c0_i32_0 = arith.constant 0 : i32
    %c0_i32_1 = arith.constant 0 : i32
    return %arg0, %c0_i32, %c0_i32_0 : i32, i32, i32
  }
}

</mosaic_0001>

<llo_original>
// kernel: tpu_custom_call.1
$region0: #{tpu_custom_call.1}
  #allocation0 [shape = 'u32[]', space=smem, size = 0x4, offset = 0x4, fixed_abs, tag = 'smem constant byte address 0x4 - core index']
  #allocation1 [shape = 'u32[144,128]{1,0:T(1,128)}', space=vmem, size = 0x12000, scoped, tag = 'internal scratch']
  #allocation2 [shape = 'f32[8,64]{1,0:T(8,128)}', space=vmem, size = 0x1000, scoped, tag = 'scratch operand']
  %s0 = inlined_call_operand.hbm [shape: f32[2,8,32], index: 0, kind: input, shape index: {}]
  %s1 = inlined_call_operand.hbm [shape: f32[2,8,32], index: 1, kind: input, shape index: {}]
  %s2 = inlined_call_operand.hbm [shape: f32[2,8,32], index: 2, kind: input, shape index: {}]
  %s3 = inlined_call_operand.vmem [shape: f32[1,32], index: 3, kind: input, shape index: {}]
  %s4 = inlined_call_operand.vmem [shape: f32[1,32], index: 4, kind: input, shape index: {}]
  %s5 = inlined_call_operand.vmem [shape: f32[32,64], index: 5, kind: input, shape index: {}]
  %s6 = inlined_call_operand.vmem [shape: f32[32,64], index: 6, kind: input, shape index: {}]
  %s7 = inlined_call_operand.vmem [shape: f32[32,64], index: 7, kind: input, shape index: {}]
  %s8 = inlined_call_operand.vmem [shape: f32[64,32], index: 8, kind: input, shape index: {}]
  %s9 = inlined_call_operand.vmem [shape: f32[1,32], index: 9, kind: input, shape index: {}]
  %s10 = inlined_call_operand.hbm [shape: f32[2,8,32], index: 10, kind: output, shape index: {}]
  %s11 = sld [smem:[#allocation0]]
  $region85: #{tpu_custom_call.1} parent=0
    _
  %s13 = ssub.s32 1, %s11
  %s14 = scalar_select 0, %s13, %s11
  $region1: #{tpu_custom_call.1} parent=0
    #allocation3 [shape = 'u8[8192]{0}', space=vmem, size = 0x2000, scoped, tag = 'input window, operand 0']
    #allocation4 [shape = 's32[2]{0}', space=sflag, size = 0x8, scoped, tag = 'scoped memory for tpu_custom_call.1']
    #allocation5 [shape = 's32[2]{0}', space=sflag, size = 0x8, scoped, tag = 'scoped memory for tpu_custom_call.1']
    #allocation6 [shape = 'u8[8192]{0}', space=vmem, size = 0x2000, scoped, tag = 'input window, operand 1']
    #allocation7 [shape = 's32[2]{0}', space=sflag, size = 0x8, scoped, tag = 'scoped memory for tpu_custom_call.1']
    #allocation8 [shape = 'u8[8192]{0}', space=vmem, size = 0x2000, scoped, tag = 'input window, operand 2']
    #allocation9 [shape = 'u8[8192]{0}', space=vmem, size = 0x2000, scoped, tag = 'output window, operand 0']
    %15 = vsyncpa [#allocation4], 0
    %s16 = scalar_lea.sflag [#allocation4], 1
    %17 = vsyncpa %s16, 0
    %18 = vsyncpa [#allocation7], 0
    %s19 = scalar_lea.sflag [#allocation7], 1
    %20 = vsyncpa %s19, 0
    %21 = vsyncpa [#allocation5], 0
    %s22 = scalar_lea.sflag [#allocation5], 1
    %23 = vsyncpa %s22, 0
    loop: start=0, step=1, limit=4
    $region2: #{tpu_custom_call.1} parent=1 // loop_pre_header
      _
    $region3: #{tpu_custom_call.1} parent=1 // loop_header
      %s25 = sphi 0, %s29
      %p26 = scmp.ge.s32.totalorder %s25, 4
      %s35 = sphi 0, %s37
      %s38 = sphi 0, %s35
      %s39 = sphi 0, %s38
      %s55 = sphi 0, %s39
      %s61 = sphi 0, %s63
      %s64 = sphi 0, %s61
      %s65 = sphi 0, %s64
      %s81 = sphi 0, %s65
      %s87 = sphi 0, %s89
      %s90 = sphi 0, %s87
      %s91 = sphi 0, %s90
      %s107 = sphi 0, %s91
      %s111 = sphi 0, %s111
      %s113 = sphi 0, %s111
      %s114 = sphi 0, %s113
      %s128 = sphi 0, %s114
      %s132 = sphi 0, %s132
      %s134 = sphi 0, %s132
      %s135 = sphi 0, %s134
      %s149 = sphi 0, %s135
      %s153 = sphi 0, %s153
      %s155 = sphi 0, %s153
      %s156 = sphi 0, %s155
      %s170 = sphi 0, %s156
      %s174 = sphi 0, %s174
      %s176 = sphi 0, %s174
      %s177 = sphi 0, %s176
      %s191 = sphi 0, %s177
      %s195 = sphi 0, %s195
      %s197 = sphi 0, %s195
      %s198 = sphi 0, %s197
      %s212 = sphi 0, %s198
      %s216 = sphi 0, %s216
      %s218 = sphi 0, %s216
      %s219 = sphi 0, %s218
      %s233 = sphi 0, %s219
      %s237 = sphi 0, %s237
      %s239 = sphi 0, %s237
      %s240 = sphi 0, %s239
      %s254 = sphi 0, %s240
      %s260 = sphi 0, %s262
      %s263 = sphi 0, %s260
      %s264 = sphi 0, %s263
      %s280 = sphi 0, %s264
    $region4: #{tpu_custom_call.1} parent=1 // loop_header_branch
      %28 = sbr.rel (%p26) target = $region8
    $region5: #{tpu_custom_call.1} parent=1 // loop_body
      %s30 = ssub.s32 %s25, 1
      %s31 = ssub.s32 %s25, 2
      %s32 = sadd.s32 %s25, 1
      %s33 = ssub.s32 %s25, %s32
      %p34 = scmp.eq.s32.totalorder %s33, 0
      %s36 = sadd.s32 %s35, 1
      %s37 = scalar_select %p34, %s35, %s36
      %p40 = pneg %p34
      %p41 = scmp.eq.s32.totalorder %s25, 1
      %p42 = por %p40, %p41
      %p43 = scmp.ne.s32.totalorder %s35, %s38
      %p44 = scmp.eq.s32.totalorder %s25, 0
      %p45 = por %p43, %p44
      %p46 = scmp.ne.s32.totalorder %s35, %s38
      %p47 = scmp.eq.s32.totalorder %s30, 1
      %p48 = por %p46, %p47
      %p49 = scmp.ne.s32.totalorder %s38, %s39
      %p50 = scmp.eq.s32.totalorder %s30, 0
      %p51 = por %p49, %p50
      %p52 = scmp.ne.s32.totalorder %s38, %s39
      %p53 = scmp.eq.s32.totalorder %s31, 1
      %p54 = por %p52, %p53
      %p56 = scmp.ne.s32.totalorder %s39, %s55
      %p57 = scmp.eq.s32.totalorder %s31, 0
      %p58 = por %p56, %p57
      %s59 = ssub.s32 %s25, %s32
      %p60 = scmp.eq.s32.totalorder %s59, 0
      %s62 = sadd.s32 %s61, 1
      %s63 = scalar_select %p60, %s61, %s62
      %p66 = pneg %p60
      %p67 = scmp.eq.s32.totalorder %s25, 1
      %p68 = por %p66, %p67
      %p69 = scmp.ne.s32.totalorder %s61, %s64
      %p70 = scmp.eq.s32.totalorder %s25, 0
      %p71 = por %p69, %p70
      %p72 = scmp.ne.s32.totalorder %s61, %s64
      %p73 = scmp.eq.s32.totalorder %s30, 1
      %p74 = por %p72, %p73
      %p75 = scmp.ne.s32.totalorder %s64, %s65
      %p76 = scmp.eq.s32.totalorder %s30, 0
      %p77 = por %p75, %p76
      %p78 = scmp.ne.s32.totalorder %s64, %s65
      %p79 = scmp.eq.s32.totalorder %s31, 1
      %p80 = por %p78, %p79
      %p82 = scmp.ne.s32.totalorder %s65, %s81
      %p83 = scmp.eq.s32.totalorder %s31, 0
      %p84 = por %p82, %p83
      %s85 = ssub.s32 %s25, %s32
      %p86 = scmp.eq.s32.totalorder %s85, 0
      %s88 = sadd.s32 %s87, 1
      %s89 = scalar_select %p86, %s87, %s88
      %p92 = pneg %p86
      %p93 = scmp.eq.s32.totalorder %s25, 1
      %p94 = por %p92, %p93
      %p95 = scmp.ne.s32.totalorder %s87, %s90
      %p96 = scmp.eq.s32.totalorder %s25, 0
      %p97 = por %p95, %p96
      %p98 = scmp.ne.s32.totalorder %s87, %s90
      %p99 = scmp.eq.s32.totalorder %s30, 1
      %p100 = por %p98, %p99
      %p101 = scmp.ne.s32.totalorder %s90, %s91
      %p102 = scmp.eq.s32.totalorder %s30, 0
      %p103 = por %p101, %p102
      %p104 = scmp.ne.s32.totalorder %s90, %s91
      %p105 = scmp.eq.s32.totalorder %s31, 1
      %p106 = por %p104, %p105
      %p108 = scmp.ne.s32.totalorder %s91, %s107
      %p109 = scmp.eq.s32.totalorder %s31, 0
      %p110 = por %p108, %p109
      %s112 = sadd.s32 %s111, 1
      %p115 = scmp.eq.s32.totalorder %s25, 1
      %p116 = scmp.ne.s32.totalorder %s111, %s113
      %p117 = scmp.eq.s32.totalorder %s25, 0
      %p118 = por %p116, %p117
      %p119 = scmp.ne.s32.totalorder %s111, %s113
      %p120 = scmp.eq.s32.totalorder %s30, 1
      %p121 = por %p119, %p120
      %p122 = scmp.ne.s32.totalorder %s113, %s114
      %p123 = scmp.eq.s32.totalorder %s30, 0
      %p124 = por %p122, %p123
      %p125 = scmp.ne.s32.totalorder %s113, %s114
      %p126 = scmp.eq.s32.totalorder %s31, 1
      %p127 = por %p125, %p126
      %p129 = scmp.ne.s32.totalorder %s114, %s128
      %p130 = scmp.eq.s32.totalorder %s31, 0
      %p131 = por %p129, %p130
      %s133 = sadd.s32 %s132, 1
      %p136 = scmp.eq.s32.totalorder %s25, 1
      %p137 = scmp.ne.s32.totalorder %s132, %s134
      %p138 = scmp.eq.s32.totalorder %s25, 0
      %p139 = por %p137, %p138
      %p140 = scmp.ne.s32.totalorder %s132, %s134
      %p141 = scmp.eq.s32.totalorder %s30, 1
      %p142 = por %p140, %p141
      %p143 = scmp.ne.s32.totalorder %s134, %s135
      %p144 = scmp.eq.s32.totalorder %s30, 0
      %p145 = por %p143, %p144
      %p146 = scmp.ne.s32.totalorder %s134, %s135
      %p147 = scmp.eq.s32.totalorder %s31, 1
      %p148 = por %p146, %p147
      %p150 = scmp.ne.s32.totalorder %s135, %s149
      %p151 = scmp.eq.s32.totalorder %s31, 0
      %p152 = por %p150, %p151
      %s154 = sadd.s32 %s153, 1
      %p157 = scmp.eq.s32.totalorder %s25, 1
      %p158 = scmp.ne.s32.totalorder %s153, %s155
      %p159 = scmp.eq.s32.totalorder %s25, 0
      %p160 = por %p158, %p159
      %p161 = scmp.ne.s32.totalorder %s153, %s155
      %p162 = scmp.eq.s32.totalorder %s30, 1
      %p163 = por %p161, %p162
      %p164 = scmp.ne.s32.totalorder %s155, %s156
      %p165 = scmp.eq.s32.totalorder %s30, 0
      %p166 = por %p164, %p165
      %p167 = scmp.ne.s32.totalorder %s155, %s156
      %p168 = scmp.eq.s32.totalorder %s31, 1
      %p169 = por %p167, %p168
      %p171 = scmp.ne.s32.totalorder %s156, %s170
      %p172 = scmp.eq.s32.totalorder %s31, 0
      %p173 = por %p171, %p172
      %s175 = sadd.s32 %s174, 1
      %p178 = scmp.eq.s32.totalorder %s25, 1
      %p179 = scmp.ne.s32.totalorder %s174, %s176
      %p180 = scmp.eq.s32.totalorder %s25, 0
      %p181 = por %p179, %p180
      %p182 = scmp.ne.s32.totalorder %s174, %s176
      %p183 = scmp.eq.s32.totalorder %s30, 1
      %p184 = por %p182, %p183
      %p185 = scmp.ne.s32.totalorder %s176, %s177
      %p186 = scmp.eq.s32.totalorder %s30, 0
      %p187 = por %p185, %p186
      %p188 = scmp.ne.s32.totalorder %s176, %s177
      %p189 = scmp.eq.s32.totalorder %s31, 1
      %p190 = por %p188, %p189
      %p192 = scmp.ne.s32.totalorder %s177, %s191
      %p193 = scmp.eq.s32.totalorder %s31, 0
      %p194 = por %p192, %p193
      %s196 = sadd.s32 %s195, 1
      %p199 = scmp.eq.s32.totalorder %s25, 1
      %p200 = scmp.ne.s32.totalorder %s195, %s197
      %p201 = scmp.eq.s32.totalorder %s25, 0
      %p202 = por %p200, %p201
      %p203 = scmp.ne.s32.totalorder %s195, %s197
      %p204 = scmp.eq.s32.totalorder %s30, 1
      %p205 = por %p203, %p204
      %p206 = scmp.ne.s32.totalorder %s197, %s198
      %p207 = scmp.eq.s32.totalorder %s30, 0
      %p208 = por %p206, %p207
      %p209 = scmp.ne.s32.totalorder %s197, %s198
      %p210 = scmp.eq.s32.totalorder %s31, 1
      %p211 = por %p209, %p210
      %p213 = scmp.ne.s32.totalorder %s198, %s212
      %p214 = scmp.eq.s32.totalorder %s31, 0
      %p215 = por %p213, %p214
      %s217 = sadd.s32 %s216, 1
      %p220 = scmp.eq.s32.totalorder %s25, 1
      %p221 = scmp.ne.s32.totalorder %s216, %s218
      %p222 = scmp.eq.s32.totalorder %s25, 0
      %p223 = por %p221, %p222
      %p224 = scmp.ne.s32.totalorder %s216, %s218
      %p225 = scmp.eq.s32.totalorder %s30, 1
      %p226 = por %p224, %p225
      %p227 = scmp.ne.s32.totalorder %s218, %s219
      %p228 = scmp.eq.s32.totalorder %s30, 0
      %p229 = por %p227, %p228
      %p230 = scmp.ne.s32.totalorder %s218, %s219
      %p231 = scmp.eq.s32.totalorder %s31, 1
      %p232 = por %p230, %p231
      %p234 = scmp.ne.s32.totalorder %s219, %s233
      %p235 = scmp.eq.s32.totalorder %s31, 0
      %p236 = por %p234, %p235
      %s238 = sadd.s32 %s237, 1
      %p241 = scmp.eq.s32.totalorder %s25, 1
      %p242 = scmp.ne.s32.totalorder %s237, %s239
      %p243 = scmp.eq.s32.totalorder %s25, 0
      %p244 = por %p242, %p243
      %p245 = scmp.ne.s32.totalorder %s237, %s239
      %p246 = scmp.eq.s32.totalorder %s30, 1
      %p247 = por %p245, %p246
      %p248 = scmp.ne.s32.totalorder %s239, %s240
      %p249 = scmp.eq.s32.totalorder %s30, 0
      %p250 = por %p248, %p249
      %p251 = scmp.ne.s32.totalorder %s239, %s240
      %p252 = scmp.eq.s32.totalorder %s31, 1
      %p253 = por %p251, %p252
      %p255 = scmp.ne.s32.totalorder %s240, %s254
      %p256 = scmp.eq.s32.totalorder %s31, 0
      %p257 = por %p255, %p256
      %s258 = ssub.s32 %s25, %s32
      %p259 = scmp.eq.s32.totalorder %s258, 0
      %s261 = sadd.s32 %s260, 1
      %s262 = scalar_select %p259, %s260, %s261
      %p265 = pneg %p259
      %p266 = scmp.eq.s32.totalorder %s25, 1
      %p267 = por %p265, %p266
      %p268 = scmp.ne.s32.totalorder %s260, %s263
      %p269 = scmp.eq.s32.totalorder %s25, 0
      %p270 = por %p268, %p269
      %p271 = scmp.ne.s32.totalorder %s260, %s263
      %p272 = scmp.eq.s32.totalorder %s30, 1
      %p273 = por %p271, %p272
      %p274 = scmp.ne.s32.totalorder %s263, %s264
      %p275 = scmp.eq.s32.totalorder %s30, 0
      %p276 = por %p274, %p275
      %p277 = scmp.ne.s32.totalorder %s263, %s264
      %p278 = scmp.eq.s32.totalorder %s31, 1
      %p279 = por %p277, %p278
      %p281 = scmp.ne.s32.totalorder %s264, %s280
      %p282 = scmp.eq.s32.totalorder %s31, 0
      %p283 = por %p281, %p282
      %p284 = scmp.le.s32.totalorder 1, %s25
      %p285 = scmp.lt.s32.totalorder %s25, 3
      %p286 = pnand %p284, %p285
      %p287 = pneg %p286
      // Predicated region
      $region9: #{tpu_custom_call.1} parent=5 // pred_check
        _
      $region10: #{tpu_custom_call.1} parent=5 // pred_check_branch
        %289 = sbr.rel (%p286) target = $region12
      $region11: #{tpu_custom_call.1} parent=5 // pred_region
        %s290 = ssub.s32 %s25, 1
        // Predicated region
        $region13: #{tpu_custom_call.1} parent=11 // pred_check
          %p291 = pneg %p124
        $region14: #{tpu_custom_call.1} parent=11 // pred_check_branch
          %293 = sbr.rel (%p291) target = $region16
        $region15: #{tpu_custom_call.1} parent=11 // pred_region
          _
        $region16: #{tpu_custom_call.1} parent=11 // pred_fallthru
          _
        // Predicated region
        $region17: #{tpu_custom_call.1} parent=11 // pred_check
          %p294 = pneg %p145
        $region18: #{tpu_custom_call.1} parent=11 // pred_check_branch
          %296 = sbr.rel (%p294) target = $region20
        $region19: #{tpu_custom_call.1} parent=11 // pred_region
          _
        $region20: #{tpu_custom_call.1} parent=11 // pred_fallthru
          _
        // Predicated region
        $region21: #{tpu_custom_call.1} parent=11 // pred_check
          %p297 = pneg %p166
        $region22: #{tpu_custom_call.1} parent=11 // pred_check_branch
          %299 = sbr.rel (%p297) target = $region24
        $region23: #{tpu_custom_call.1} parent=11 // pred_region
          _
        $region24: #{tpu_custom_call.1} parent=11 // pred_fallthru
          _
        // Predicated region
        $region25: #{tpu_custom_call.1} parent=11 // pred_check
          %p300 = pneg %p187
        $region26: #{tpu_custom_call.1} parent=11 // pred_check_branch
          %302 = sbr.rel (%p300) target = $region28
        $region27: #{tpu_custom_call.1} parent=11 // pred_region
          _
        $region28: #{tpu_custom_call.1} parent=11 // pred_fallthru
          _
        // Predicated region
        $region29: #{tpu_custom_call.1} parent=11 // pred_check
          %p303 = pneg %p208
        $region30: #{tpu_custom_call.1} parent=11 // pred_check_branch
          %305 = sbr.rel (%p303) target = $region32
        $region31: #{tpu_custom_call.1} parent=11 // pred_region
          _
        $region32: #{tpu_custom_call.1} parent=11 // pred_fallthru
          _
        // Predicated region
        $region33: #{tpu_custom_call.1} parent=11 // pred_check
          %p306 = pneg %p229
        $region34: #{tpu_custom_call.1} parent=11 // pred_check_branch
          %308 = sbr.rel (%p306) target = $region36
        $region35: #{tpu_custom_call.1} parent=11 // pred_region
          _
        $region36: #{tpu_custom_call.1} parent=11 // pred_fallthru
          _
        // Predicated region
        $region37: #{tpu_custom_call.1} parent=11 // pred_check
          %p309 = pneg %p250
        $region38: #{tpu_custom_call.1} parent=11 // pred_check_branch
          %311 = sbr.rel (%p309) target = $region40
        $region39: #{tpu_custom_call.1} parent=11 // pred_region
          _
        $region40: #{tpu_custom_call.1} parent=11 // pred_fallthru
          _
      $region12: #{tpu_custom_call.1} parent=5 // pred_fallthru
        _
      %p312 = scmp.lt.s32.totalorder %s25, 2
      // Predicated region
      $region41: #{tpu_custom_call.1} parent=5 // pred_check
        %p313 = pneg %p312
      $region42: #{tpu_custom_call.1} parent=5 // pred_check_branch
        %315 = sbr.rel (%p313) target = $region44
      $region43: #{tpu_custom_call.1} parent=5 // pred_region
        // Predicated region
        $region45: #{tpu_custom_call.1} parent=43 // pred_check
          %p316 = pneg %p45
        $region46: #{tpu_custom_call.1} parent=43 // pred_check_branch
          %318 = sbr.rel (%p316) target = $region48
        $region47: #{tpu_custom_call.1} parent=43 // pred_region
          %s319 = sand.u32 %s35, 1
          %s320 = scalar_lea.sflag [#allocation4], %s319
          %s321 = sand.u32 %s35, 1
          %s322 = smul.addr %s321, 8
          %s323 = scalar_lea.vmem [#allocation3], %s322
          %s325 = ssub.s32 128, 128
          %326 = vsyncadd %s320, %s325
          %s327 = smul.addr %s25, 128
          %s328 = scalar_lea.hbm %s0, %s327
          %s330 = sshll.u32 %s323, 4
          %s331 = int_to_ptr.vmem [resolvable:$true] %s330
          %333 = dma.hbm_to_vmem [thread:$0]  %s328, 128, %s331, %s320
        $region48: #{tpu_custom_call.1} parent=43 // pred_fallthru
          _
        // Predicated region
        $region49: #{tpu_custom_call.1} parent=43 // pred_check
          %p334 = pneg %p71
        $region50: #{tpu_custom_call.1} parent=43 // pred_check_branch
          %336 = sbr.rel (%p334) target = $region52
        $region51: #{tpu_custom_call.1} parent=43 // pred_region
          %s337 = sand.u32 %s25, 1
          %s338 = scalar_lea.sflag [#allocation7], %s337
          %s339 = sand.u32 %s61, 1
          %s340 = smul.addr %s339, 8
          %s341 = scalar_lea.vmem [#allocation6], %s340
          %s343 = ssub.s32 128, 128
          %344 = vsyncadd %s338, %s343
          %s345 = smul.addr %s25, 128
          %s346 = scalar_lea.hbm %s1, %s345
          %s348 = sshll.u32 %s341, 4
          %s349 = int_to_ptr.vmem [resolvable:$true] %s348
          %351 = dma.hbm_to_vmem [thread:$0]  %s346, 128, %s349, %s338
        $region52: #{tpu_custom_call.1} parent=43 // pred_fallthru
          _
        // Predicated region
        $region53: #{tpu_custom_call.1} parent=43 // pred_check
          %p352 = pneg %p97
        $region54: #{tpu_custom_call.1} parent=43 // pred_check_branch
          %354 = sbr.rel (%p352) target = $region56
        $region55: #{tpu_custom_call.1} parent=43 // pred_region
          %s355 = sand.u32 %s25, 1
          %s356 = scalar_lea.sflag [#allocation7], %s355
          %s357 = sand.u32 %s87, 1
          %s358 = smul.addr %s357, 8
          %s359 = scalar_lea.vmem [#allocation8], %s358
          %s361 = ssub.s32 128, 128
          %362 = vsyncadd %s356, %s361
          %s363 = smul.addr %s25, 128
          %s364 = scalar_lea.hbm %s2, %s363
          %s366 = sshll.u32 %s359, 4
          %s367 = int_to_ptr.vmem [resolvable:$true] %s366
          %369 = dma.hbm_to_vmem [thread:$0]  %s364, 128, %s367, %s356
        $region56: #{tpu_custom_call.1} parent=43 // pred_fallthru
          _
      $region44: #{tpu_custom_call.1} parent=5 // pred_fallthru
        _
      %p370 = scmp.le.s32.totalorder 1, %s25
      %p371 = scmp.lt.s32.totalorder %s25, 3
      %p372 = pnand %p370, %p371
      %p373 = pneg %p372
      // Predicated region
      $region57: #{tpu_custom_call.1} parent=5 // pred_check
        _
      $region58: #{tpu_custom_call.1} parent=5 // pred_check_branch
        %375 = sbr.rel (%p372) target = $region60
      $region59: #{tpu_custom_call.1} parent=5 // pred_region
        %s376 = ssub.s32 %s25, 1
        %s377 = sand.u32 %s38, 1
        %s378 = scalar_lea.sflag [#allocation4], %s377
        %s379 = sand.u32 %s38, 1
        %s380 = smul.addr %s379, 8
        %s381 = scalar_lea.vmem [#allocation3], %s380
        // Predicated region
        $region61: #{tpu_custom_call.1} parent=59 // pred_check
          %p382 = pneg %p51
        $region62: #{tpu_custom_call.1} parent=59 // pred_check_branch
          %384 = sbr.rel (%p382) target = $region64
        $region63: #{tpu_custom_call.1} parent=59 // pred_region
          %385 = dma.done %s378, 128
        $region64: #{tpu_custom_call.1} parent=59 // pred_fallthru
          _
        %s386 = sand.u32 %s30, 1
        %s387 = scalar_lea.sflag [#allocation7], %s386
        %s388 = sand.u32 %s64, 1
        %s389 = smul.addr %s388, 8
        %s390 = scalar_lea.vmem [#allocation6], %s389
        // Predicated region
        $region65: #{tpu_custom_call.1} parent=59 // pred_check
          %p391 = pneg %p77
        $region66: #{tpu_custom_call.1} parent=59 // pred_check_branch
          %393 = sbr.rel (%p391) target = $region68
        $region67: #{tpu_custom_call.1} parent=59 // pred_region
          %394 = dma.done %s387, 128
        $region68: #{tpu_custom_call.1} parent=59 // pred_fallthru
          _
        %s395 = sand.u32 %s30, 1
        %s396 = scalar_lea.sflag [#allocation7], %s395
        %s397 = sand.u32 %s90, 1
        %s398 = smul.addr %s397, 8
        %s399 = scalar_lea.vmem [#allocation8], %s398
        // Predicated region
        $region69: #{tpu_custom_call.1} parent=59 // pred_check
          %p400 = pneg %p103
        $region70: #{tpu_custom_call.1} parent=59 // pred_check_branch
          %402 = sbr.rel (%p400) target = $region72
        $region71: #{tpu_custom_call.1} parent=59 // pred_region
          %403 = dma.done %s396, 128
        $region72: #{tpu_custom_call.1} parent=59 // pred_fallthru
          _
        %s404 = sand.u32 %s38, 1
        %s405 = scalar_lea.sflag [#allocation4], %s404
        %s406 = sand.u32 %s38, 1
        %s407 = smul.addr %s406, 8
        %s408 = scalar_lea.vmem [#allocation3], %s407
        %p409 = pneg %p51
        %p410 = pneg %p48
        %s411 = sand.u32 %s30, 1
        %s412 = scalar_lea.sflag [#allocation7], %s411
        %s413 = sand.u32 %s64, 1
        %s414 = smul.addr %s413, 8
        %s415 = scalar_lea.vmem [#allocation6], %s414
        %p416 = pneg %p77
        %p417 = pneg %p74
        %s418 = sand.u32 %s30, 1
        %s419 = scalar_lea.sflag [#allocation7], %s418
        %s420 = sand.u32 %s90, 1
        %s421 = smul.addr %s420, 8
        %s422 = scalar_lea.vmem [#allocation8], %s421
        %p423 = pneg %p103
        %p424 = pneg %p100
        %p425 = pneg %p124
        %p426 = pneg %p121
        %p427 = pneg %p145
        %p428 = pneg %p142
        %p429 = pneg %p166
        %p430 = pneg %p163
        %p431 = pneg %p187
        %p432 = pneg %p184
        %p433 = pneg %p208
        %p434 = pneg %p205
        %p435 = pneg %p229
        %p436 = pneg %p226
        %p437 = pneg %p250
        %p438 = pneg %p247
        %p439 = pneg %p276
        %p440 = pneg %p273
        %s441 = sand.u32 %s263, 1
        %s442 = scalar_lea.sflag [#allocation5], %s441
        %s443 = sand.u32 %s263, 1
        %s444 = smul.addr %s443, 8
        %s445 = scalar_lea.vmem [#allocation9], %s444
        %v446 = vld [vmem:[%s3] sm:$0x1]
        %v447 = vld [vmem:[%s4] sm:$0x1]
        %v448 = vld [vmem:[%s381] sm:$0xff]
        %vm449 = vcmask 261120
        %v450 = vsel %vm449, %v448, 0.0
        %451 = vadd.xlane.f32.xlu0 %v450
        %v452 = vpop.xlane.xlu0 %451
        %v453 = vrcp.pop 32.0
        %v454 = vmul.f32 %v452, %v453
        %v455 = vsub.f32 %v448, %v454
        %v456 = vmul.f32 %v455, %v455
        %v457 = vsel %vm449, %v456, 0.0
        %458 = vadd.xlane.f32.xlu0 %v457
        %v459 = vpop.xlane.xlu0 %458
        %v460 = vmul.f32 %v459, %v453
        %v461 = vadd.f32 %v460, 1e-05
        %v462 = vrsqrt.pop %v461
        %v463 = vmul.f32 %v455, %v462
        %v465 = vlaneseq
        %v466 = vshrl.u32 %v465, 7
        %v467 = vsub.s32 0, %v466
        %v468 = vrot.slane %v446, %v467
        %v470 = vmul.f32 %v463, %v468
        %v472 = vlaneseq
        %v473 = vshrl.u32 %v472, 7
        %v474 = vsub.s32 0, %v473
        %v475 = vrot.slane %v447, %v474
        %v477 = vadd.f32 %v470, %v475
        %v478 = vld [vmem:[%s390] sm:$0xff]
        %v479 = vsel %vm449, %v478, 0.0
        %480 = vadd.xlane.f32.xlu0 %v479
        %v481 = vpop.xlane.xlu0 %480
        %v482 = vmul.f32 %v481, %v453
        %v483 = vsub.f32 %v478, %v482
        %v484 = vmul.f32 %v483, %v483
        %v485 = vsel %vm449, %v484, 0.0
        %486 = vadd.xlane.f32.xlu0 %v485
        %v487 = vpop.xlane.xlu0 %486
        %v488 = vmul.f32 %v487, %v453
        %v489 = vadd.f32 %v488, 1e-05
        %v490 = vrsqrt.pop %v489
        %v491 = vmul.f32 %v483, %v490
        %v492 = vmul.f32 %v491, %v468
        %v493 = vadd.f32 %v492, %v475
        %v494 = vld [vmem:[%s399] sm:$0xff]
        %v495 = vsel %vm449, %v494, 0.0
        %496 = vadd.xlane.f32.xlu0 %v495
        %v497 = vpop.xlane.xlu0 %496
        %v498 = vmul.f32 %v497, %v453
        %v499 = vsub.f32 %v494, %v498
        %v500 = vmul.f32 %v499, %v499
        %v501 = vsel %vm449, %v500, 0.0
        %502 = vadd.xlane.f32.xlu0 %v501
        %v503 = vpop.xlane.xlu0 %502
        %v504 = vmul.f32 %v503, %v453
        %v505 = vadd.f32 %v504, 1e-05
        %v506 = vrsqrt.pop %v505
        %v507 = vmul.f32 %v499, %v506
        %v508 = vmul.f32 %v507, %v468
        %v509 = vadd.f32 %v508, %v475
        %v510 = vld [vmem:[%s5] sm:$0xff]
        %v511 = vld [vmem:[%s5 + $0x8] sm:$0xff]
        %v512 = vld [vmem:[%s5 + $0x10] sm:$0xff]
        %v513 = vld [vmem:[%s5 + $0x18] sm:$0xff]
        %v515 = vsel %vm449, %v477, 0
        %517 = vmatprep.subr.mxu0 0.0
        %518 = vmatpush1.msra.mxu0 0.0
        %519 = vmatprep.subr.mxu0 0.0
        %520 = vmatpush1.msra.mxu0 0.0
        %521 = vmatprep.subr.mxu0 0.0
        %522 = vmatpush1.msra.mxu0 0.0
        %523 = vmatprep.subr.mxu0 0.0
        %524 = vmatpush1.msra.mxu0 0.0
        %525 = vmatprep.subr.mxu0 0.0
        %526 = vmatpush1.msra.mxu0 0.0
        %527 = vmatprep.subr.mxu0 0.0
        %528 = vmatpush1.msra.mxu0 0.0
        %529 = vmatprep.subr.mxu0 0.0
        %530 = vmatpush1.msra.mxu0 0.0
        %531 = vmatprep.subr.mxu0 0.0
        %532 = vmatpush1.msra.mxu0 0.0
        %533 = vmatprep.subr.mxu0 0.0
        %534 = vmatpush1.msra.mxu0 0.0
        %535 = vmatprep.subr.mxu0 0.0
        %536 = vmatpush1.msra.mxu0 0.0
        %537 = vmatprep.subr.mxu0 0.0
        %538 = vmatpush1.msra.mxu0 0.0
        %539 = vmatprep.subr.mxu0 0.0
        %540 = vmatpush1.msra.mxu0 0.0
        %541 = vmatprep.subr.mxu0 0.0
        %542 = vmatpush1.msra.mxu0 %v513
        %543 = vmatprep.subr.mxu0 0.0
        %544 = vmatpush1.msra.mxu0 %v512
        %545 = vmatprep.subr.mxu0 0.0
        %546 = vmatpush1.msra.mxu0 %v511
        %547 = vmatprep.subr.mxu0 0.0
        %548 = vmatpush1.msra.mxu0 %v510
        %549 = vmatprep.subr.mxu0 0.0
        %550 = vmatpush2.msra.mxu0 0.0
        %551 = vmatprep.subr.mxu0 0.0
        %552 = vmatpush2.msra.mxu0 0.0
        %553 = vmatprep.subr.mxu0 0.0
        %554 = vmatpush2.msra.mxu0 0.0
        %555 = vmatprep.subr.mxu0 0.0
        %556 = vmatpush2.msra.mxu0 0.0
        %557 = vmatprep.subr.mxu0 0.0
        %558 = vmatpush2.msra.mxu0 0.0
        %559 = vmatprep.subr.mxu0 0.0
        %560 = vmatpush2.msra.mxu0 0.0
        %561 = vmatprep.subr.mxu0 0.0
        %562 = vmatpush2.msra.mxu0 0.0
        %563 = vmatprep.subr.mxu0 0.0
        %564 = vmatpush2.msra.mxu0 0.0
        %565 = vmatprep.subr.mxu0 0.0
        %566 = vmatpush2.msra.mxu0 0.0
        %567 = vmatprep.subr.mxu0 0.0
        %568 = vmatpush2.msra.mxu0 0.0
        %569 = vmatprep.subr.mxu0 0.0
        %570 = vmatpush2.msra.mxu0 0.0
        %571 = vmatprep.subr.mxu0 0.0
        %572 = vmatpush2.msra.mxu0 0.0
        %573 = vmatprep.subr.mxu0 0.0
        %574 = vmatpush2.msra.mxu0 0.0
        %575 = vmatprep.subr.mxu0 0.0
        %576 = vmatpush2.msra.mxu0 0.0
        %577 = vmatprep.subr.mxu0 0.0
        %578 = vmatpush2.msra.mxu0 0.0
        %579 = vmatprep.subr.mxu0 0.0
        %580 = vmatpush2.msra.mxu0 0.0
        %581 = vmatprep.mubr.f32.mxu0 0.0
        %582 = vmatmul.mubr.f32.gmra.mxu0 %v515
        %v583 = vpop.f32.mrf.mxu0
        %v584 = vadd.f32 0.0, %v583
        %v585 = vpop.f32.mrf.mxu0
        %586 = vdwg.mxu0
        %v587 = vld [vmem:[%s6] sm:$0xff]
        %v588 = vld [vmem:[%s6 + $0x8] sm:$0xff]
        %v589 = vld [vmem:[%s6 + $0x10] sm:$0xff]
        %v590 = vld [vmem:[%s6 + $0x18] sm:$0xff]
        %v592 = vsel %vm449, %v493, 0
        %594 = vmatprep.subr.mxu0 0.0
        %595 = vmatpush1.msra.mxu0 0.0
        %596 = vmatprep.subr.mxu0 0.0
        %597 = vmatpush1.msra.mxu0 0.0
        %598 = vmatprep.subr.mxu0 0.0
        %599 = vmatpush1.msra.mxu0 0.0
        %600 = vmatprep.subr.mxu0 0.0
        %601 = vmatpush1.msra.mxu0 0.0
        %602 = vmatprep.subr.mxu0 0.0
        %603 = vmatpush1.msra.mxu0 0.0
        %604 = vmatprep.subr.mxu0 0.0
        %605 = vmatpush1.msra.mxu0 0.0
        %606 = vmatprep.subr.mxu0 0.0
        %607 = vmatpush1.msra.mxu0 0.0
        %608 = vmatprep.subr.mxu0 0.0
        %609 = vmatpush1.msra.mxu0 0.0
        %610 = vmatprep.subr.mxu0 0.0
        %611 = vmatpush1.msra.mxu0 0.0
        %612 = vmatprep.subr.mxu0 0.0
        %613 = vmatpush1.msra.mxu0 0.0
        %614 = vmatprep.subr.mxu0 0.0
        %615 = vmatpush1.msra.mxu0 0.0
        %616 = vmatprep.subr.mxu0 0.0
        %617 = vmatpush1.msra.mxu0 0.0
        %618 = vmatprep.subr.mxu0 0.0
        %619 = vmatpush1.msra.mxu0 %v590
        %620 = vmatprep.subr.mxu0 0.0
        %621 = vmatpush1.msra.mxu0 %v589
        %622 = vmatprep.subr.mxu0 0.0
        %623 = vmatpush1.msra.mxu0 %v588
        %624 = vmatprep.subr.mxu0 0.0
        %625 = vmatpush1.msra.mxu0 %v587
        %626 = vmatprep.subr.mxu0 0.0
        %627 = vmatpush2.msra.mxu0 0.0
        %628 = vmatprep.subr.mxu0 0.0
        %629 = vmatpush2.msra.mxu0 0.0
        %630 = vmatprep.subr.mxu0 0.0
        %631 = vmatpush2.msra.mxu0 0.0
        %632 = vmatprep.subr.mxu0 0.0
        %633 = vmatpush2.msra.mxu0 0.0
        %634 = vmatprep.subr.mxu0 0.0
        %635 = vmatpush2.msra.mxu0 0.0
        %636 = vmatprep.subr.mxu0 0.0
        %637 = vmatpush2.msra.mxu0 0.0
        %638 = vmatprep.subr.mxu0 0.0
        %639 = vmatpush2.msra.mxu0 0.0
        %640 = vmatprep.subr.mxu0 0.0
        %641 = vmatpush2.msra.mxu0 0.0
        %642 = vmatprep.subr.mxu0 0.0
        %643 = vmatpush2.msra.mxu0 0.0
        %644 = vmatprep.subr.mxu0 0.0
        %645 = vmatpush2.msra.mxu0 0.0
        %646 = vmatprep.subr.mxu0 0.0
        %647 = vmatpush2.msra.mxu0 0.0
        %648 = vmatprep.subr.mxu0 0.0
        %649 = vmatpush2.msra.mxu0 0.0
        %650 = vmatprep.subr.mxu0 0.0
        %651 = vmatpush2.msra.mxu0 0.0
        %652 = vmatprep.subr.mxu0 0.0
        %653 = vmatpush2.msra.mxu0 0.0
        %654 = vmatprep.subr.mxu0 0.0
        %655 = vmatpush2.msra.mxu0 0.0
        %656 = vmatprep.subr.mxu0 0.0
        %657 = vmatpush2.msra.mxu0 0.0
        %658 = vmatprep.mubr.f32.mxu0 0.0
        %659 = vmatmul.mubr.f32.gmra.mxu0 %v592
        %v660 = vpop.f32.mrf.mxu0
        %v661 = vadd.f32 0.0, %v660
        %v662 = vpop.f32.mrf.mxu0
        %663 = vdwg.mxu0
        %v664 = vld [vmem:[%s7] sm:$0xff]
        %v665 = vld [vmem:[%s7 + $0x8] sm:$0xff]
        %v666 = vld [vmem:[%s7 + $0x10] sm:$0xff]
        %v667 = vld [vmem:[%s7 + $0x18] sm:$0xff]
        %v669 = vsel %vm449, %v509, 0
        %671 = vmatprep.subr.mxu0 0.0
        %672 = vmatpush1.msra.mxu0 0.0
        %673 = vmatprep.subr.mxu0 0.0
        %674 = vmatpush1.msra.mxu0 0.0
        %675 = vmatprep.subr.mxu0 0.0
        %676 = vmatpush1.msra.mxu0 0.0
        %677 = vmatprep.subr.mxu0 0.0
        %678 = vmatpush1.msra.mxu0 0.0
        %679 = vmatprep.subr.mxu0 0.0
        %680 = vmatpush1.msra.mxu0 0.0
        %681 = vmatprep.subr.mxu0 0.0
        %682 = vmatpush1.msra.mxu0 0.0
        %683 = vmatprep.subr.mxu0 0.0
        %684 = vmatpush1.msra.mxu0 0.0
        %685 = vmatprep.subr.mxu0 0.0
        %686 = vmatpush1.msra.mxu0 0.0
        %687 = vmatprep.subr.mxu0 0.0
        %688 = vmatpush1.msra.mxu0 0.0
        %689 = vmatprep.subr.mxu0 0.0
        %690 = vmatpush1.msra.mxu0 0.0
        %691 = vmatprep.subr.mxu0 0.0
        %692 = vmatpush1.msra.mxu0 0.0
        %693 = vmatprep.subr.mxu0 0.0
        %694 = vmatpush1.msra.mxu0 0.0
        %695 = vmatprep.subr.mxu0 0.0
        %696 = vmatpush1.msra.mxu0 %v667
        %697 = vmatprep.subr.mxu0 0.0
        %698 = vmatpush1.msra.mxu0 %v666
        %699 = vmatprep.subr.mxu0 0.0
        %700 = vmatpush1.msra.mxu0 %v665
        %701 = vmatprep.subr.mxu0 0.0
        %702 = vmatpush1.msra.mxu0 %v664
        %703 = vmatprep.subr.mxu0 0.0
        %704 = vmatpush2.msra.mxu0 0.0
        %705 = vmatprep.subr.mxu0 0.0
        %706 = vmatpush2.msra.mxu0 0.0
        %707 = vmatprep.subr.mxu0 0.0
        %708 = vmatpush2.msra.mxu0 0.0
        %709 = vmatprep.subr.mxu0 0.0
        %710 = vmatpush2.msra.mxu0 0.0
        %711 = vmatprep.subr.mxu0 0.0
        %712 = vmatpush2.msra.mxu0 0.0
        %713 = vmatprep.subr.mxu0 0.0
        %714 = vmatpush2.msra.mxu0 0.0
        %715 = vmatprep.subr.mxu0 0.0
        %716 = vmatpush2.msra.mxu0 0.0
        %717 = vmatprep.subr.mxu0 0.0
        %718 = vmatpush2.msra.mxu0 0.0
        %719 = vmatprep.subr.mxu0 0.0
        %720 = vmatpush2.msra.mxu0 0.0
        %721 = vmatprep.subr.mxu0 0.0
        %722 = vmatpush2.msra.mxu0 0.0
        %723 = vmatprep.subr.mxu0 0.0
        %724 = vmatpush2.msra.mxu0 0.0
        %725 = vmatprep.subr.mxu0 0.0
        %726 = vmatpush2.msra.mxu0 0.0
        %727 = vmatprep.subr.mxu0 0.0
        %728 = vmatpush2.msra.mxu0 0.0
        %729 = vmatprep.subr.mxu0 0.0
        %730 = vmatpush2.msra.mxu0 0.0
        %731 = vmatprep.subr.mxu0 0.0
        %732 = vmatpush2.msra.mxu0 0.0
        %733 = vmatprep.subr.mxu0 0.0
        %734 = vmatpush2.msra.mxu0 0.0
        %735 = vmatprep.mubr.f32.mxu0 0.0
        %736 = vmatmul.mubr.f32.gmra.mxu0 %v669
        %v737 = vpop.f32.mrf.mxu0
        %v738 = vadd.f32 0.0, %v737
        %v739 = vpop.f32.mrf.mxu0
        %740 = vdwg.mxu0
        %vm741 = vcmask 130048
        %v743 = vsel %vm741, %v584, 0
        %v746 = vsel %vm741, %v661, 0
        %748 = vmatprep.subr.mxu0 0.0
        %749 = vmatpush1.xpose.msra.mxu0 0.0
        %750 = vmatprep.subr.mxu0 0.0
        %751 = vmatpush1.xpose.msra.mxu0 0.0
        %752 = vmatprep.subr.mxu0 0.0
        %753 = vmatpush1.xpose.msra.mxu0 0.0
        %754 = vmatprep.subr.mxu0 0.0
        %755 = vmatpush1.xpose.msra.mxu0 0.0
        %756 = vmatprep.subr.mxu0 0.0
        %757 = vmatpush1.xpose.msra.mxu0 0.0
        %758 = vmatprep.subr.mxu0 0.0
        %759 = vmatpush1.xpose.msra.mxu0 0.0
        %760 = vmatprep.subr.mxu0 0.0
        %761 = vmatpush1.xpose.msra.mxu0 0.0
        %762 = vmatprep.subr.mxu0 0.0
        %763 = vmatpush1.xpose.msra.mxu0 0.0
        %764 = vmatprep.subr.mxu0 0.0
        %765 = vmatpush1.xpose.msra.mxu0 0.0
        %766 = vmatprep.subr.mxu0 0.0
        %767 = vmatpush1.xpose.msra.mxu0 0.0
        %768 = vmatprep.subr.mxu0 0.0
        %769 = vmatpush1.xpose.msra.mxu0 0.0
        %770 = vmatprep.subr.mxu0 0.0
        %771 = vmatpush1.xpose.msra.mxu0 0.0
        %772 = vmatprep.subr.mxu0 0.0
        %773 = vmatpush1.xpose.msra.mxu0 0.0
        %774 = vmatprep.subr.mxu0 0.0
        %775 = vmatpush1.xpose.msra.mxu0 0.0
        %776 = vmatprep.subr.mxu0 0.0
        %777 = vmatpush1.xpose.msra.mxu0 0.0
        %778 = vmatprep.subr.mxu0 0.0
        %779 = vmatpush1.xpose.msra.mxu0 %v746
        %780 = vmatprep.subr.mxu0 0.0
        %781 = vmatpush2.xpose.msra.mxu0 0.0
        %782 = vmatprep.subr.mxu0 0.0
        %783 = vmatpush2.xpose.msra.mxu0 0.0
        %784 = vmatprep.subr.mxu0 0.0
        %785 = vmatpush2.xpose.msra.mxu0 0.0
        %786 = vmatprep.subr.mxu0 0.0
        %787 = vmatpush2.xpose.msra.mxu0 0.0
        %788 = vmatprep.subr.mxu0 0.0
        %789 = vmatpush2.xpose.msra.mxu0 0.0
        %790 = vmatprep.subr.mxu0 0.0
        %791 = vmatpush2.xpose.msra.mxu0 0.0
        %792 = vmatprep.subr.mxu0 0.0
        %793 = vmatpush2.xpose.msra.mxu0 0.0
        %794 = vmatprep.subr.mxu0 0.0
        %795 = vmatpush2.xpose.msra.mxu0 0.0
        %796 = vmatprep.subr.mxu0 0.0
        %797 = vmatpush2.xpose.msra.mxu0 0.0
        %798 = vmatprep.subr.mxu0 0.0
        %799 = vmatpush2.xpose.msra.mxu0 0.0
        %800 = vmatprep.subr.mxu0 0.0
        %801 = vmatpush2.xpose.msra.mxu0 0.0
        %802 = vmatprep.subr.mxu0 0.0
        %803 = vmatpush2.xpose.msra.mxu0 0.0
        %804 = vmatprep.subr.mxu0 0.0
        %805 = vmatpush2.xpose.msra.mxu0 0.0
        %806 = vmatprep.subr.mxu0 0.0
        %807 = vmatpush2.xpose.msra.mxu0 0.0
        %808 = vmatprep.subr.mxu0 0.0
        %809 = vmatpush2.xpose.msra.mxu0 0.0
        %810 = vmatprep.subr.mxu0 0.0
        %811 = vmatpush2.xpose.msra.mxu0 0.0
        %812 = vmatprep.mubr.f32.mxu0 0.0
        %813 = vmatmul.mubr.f32.gmra.mxu0 %v743
        %v814 = vpop.f32.mrf.mxu0
        %v815 = vadd.f32 0.0, %v814
        %v816 = vpop.f32.mrf.mxu0
        %817 = vdwg.mxu0
        %vm818 = vcmask 64512
        %v819 = vsel %vm818, %v815, -inf
        %820 = vmax.xlane.f32.xlu0 %v819
        %v821 = vpop.xlane.xlu0 %820
        %v822 = vsub.f32 %v815, %v821
        %v823 = vmul.f32 %v822, 1.442695
        %v824 = vpow.pop %v823
        %v825 = vsel %vm818, %v824, 0.0
        %826 = vadd.xlane.f32.xlu0 %v825
        %v827 = vpop.xlane.xlu0 %826
        %v828 = vrcp.pop %v827
        %v829 = vmul.f32 %v824, %v828
        %v831 = vsel %vm818, %v829, 0
        %833 = vmatprep.subr.mxu0 0.0
        %834 = vmatpush1.msra.mxu0 0.0
        %835 = vmatprep.subr.mxu0 0.0
        %836 = vmatpush1.msra.mxu0 0.0
        %837 = vmatprep.subr.mxu0 0.0
        %838 = vmatpush1.msra.mxu0 0.0
        %839 = vmatprep.subr.mxu0 0.0
        %840 = vmatpush1.msra.mxu0 0.0
        %841 = vmatprep.subr.mxu0 0.0
        %842 = vmatpush1.msra.mxu0 0.0
        %843 = vmatprep.subr.mxu0 0.0
        %844 = vmatpush1.msra.mxu0 0.0
        %845 = vmatprep.subr.mxu0 0.0
        %846 = vmatpush1.msra.mxu0 0.0
        %847 = vmatprep.subr.mxu0 0.0
        %848 = vmatpush1.msra.mxu0 0.0
        %849 = vmatprep.subr.mxu0 0.0
        %850 = vmatpush1.msra.mxu0 0.0
        %851 = vmatprep.subr.mxu0 0.0
        %852 = vmatpush1.msra.mxu0 0.0
        %853 = vmatprep.subr.mxu0 0.0
        %854 = vmatpush1.msra.mxu0 0.0
        %855 = vmatprep.subr.mxu0 0.0
        %856 = vmatpush1.msra.mxu0 0.0
        %857 = vmatprep.subr.mxu0 0.0
        %858 = vmatpush1.msra.mxu0 0.0
        %859 = vmatprep.subr.mxu0 0.0
        %860 = vmatpush1.msra.mxu0 0.0
        %861 = vmatprep.subr.mxu0 0.0
        %862 = vmatpush1.msra.mxu0 0.0
        %863 = vmatprep.subr.mxu0 0.0
        %864 = vmatpush1.msra.mxu0 %v738
        %865 = vmatprep.subr.mxu0 0.0
        %866 = vmatpush2.msra.mxu0 0.0
        %867 = vmatprep.subr.mxu0 0.0
        %868 = vmatpush2.msra.mxu0 0.0
        %869 = vmatprep.subr.mxu0 0.0
        %870 = vmatpush2.msra.mxu0 0.0
        %871 = vmatprep.subr.mxu0 0.0
        %872 = vmatpush2.msra.mxu0 0.0
        %873 = vmatprep.subr.mxu0 0.0
        %874 = vmatpush2.msra.mxu0 0.0
        %875 = vmatprep.subr.mxu0 0.0
        %876 = vmatpush2.msra.mxu0 0.0
        %877 = vmatprep.subr.mxu0 0.0
        %878 = vmatpush2.msra.mxu0 0.0
        %879 = vmatprep.subr.mxu0 0.0
        %880 = vmatpush2.msra.mxu0 0.0
        %881 = vmatprep.subr.mxu0 0.0
        %882 = vmatpush2.msra.mxu0 0.0
        %883 = vmatprep.subr.mxu0 0.0
        %884 = vmatpush2.msra.mxu0 0.0
        %885 = vmatprep.subr.mxu0 0.0
        %886 = vmatpush2.msra.mxu0 0.0
        %887 = vmatprep.subr.mxu0 0.0
        %888 = vmatpush2.msra.mxu0 0.0
        %889 = vmatprep.subr.mxu0 0.0
        %890 = vmatpush2.msra.mxu0 0.0
        %891 = vmatprep.subr.mxu0 0.0
        %892 = vmatpush2.msra.mxu0 0.0
        %893 = vmatprep.subr.mxu0 0.0
        %894 = vmatpush2.msra.mxu0 0.0
        %895 = vmatprep.subr.mxu0 0.0
        %896 = vmatpush2.msra.mxu0 0.0
        %897 = vmatprep.mubr.f32.mxu0 0.0
        %898 = vmatmul.mubr.f32.gmra.mxu0 %v831
        %v899 = vpop.f32.mrf.mxu0
        %v900 = vadd.f32 0.0, %v899
        %v901 = vpop.f32.mrf.mxu0
        %902 = vdwg.mxu0
        %903 = vst.msk [vmem:[#allocation2] sm:$0xff] %vm741, %v900
        %904 = vrot.lane.b32.xlu0 %v584, 112
        %v905 = vpop.permute.xlu0 %904
        %906 = vrot.lane.b32.xlu0 %v661, 112
        %v907 = vpop.permute.xlu0 %906
        %v908 = vsel %vm741, %v905, 0
        %v910 = vsel %vm741, %v907, 0
        %912 = vmatprep.subr.mxu0 0.0
        %913 = vmatpush1.xpose.msra.mxu0 0.0
        %914 = vmatprep.subr.mxu0 0.0
        %915 = vmatpush1.xpose.msra.mxu0 0.0
        %916 = vmatprep.subr.mxu0 0.0
        %917 = vmatpush1.xpose.msra.mxu0 0.0
        %918 = vmatprep.subr.mxu0 0.0
        %919 = vmatpush1.xpose.msra.mxu0 0.0
        %920 = vmatprep.subr.mxu0 0.0
        %921 = vmatpush1.xpose.msra.mxu0 0.0
        %922 = vmatprep.subr.mxu0 0.0
        %923 = vmatpush1.xpose.msra.mxu0 0.0
        %924 = vmatprep.subr.mxu0 0.0
        %925 = vmatpush1.xpose.msra.mxu0 0.0
        %926 = vmatprep.subr.mxu0 0.0
        %927 = vmatpush1.xpose.msra.mxu0 0.0
        %928 = vmatprep.subr.mxu0 0.0
        %929 = vmatpush1.xpose.msra.mxu0 0.0
        %930 = vmatprep.subr.mxu0 0.0
        %931 = vmatpush1.xpose.msra.mxu0 0.0
        %932 = vmatprep.subr.mxu0 0.0
        %933 = vmatpush1.xpose.msra.mxu0 0.0
        %934 = vmatprep.subr.mxu0 0.0
        %935 = vmatpush1.xpose.msra.mxu0 0.0
        %936 = vmatprep.subr.mxu0 0.0
        %937 = vmatpush1.xpose.msra.mxu0 0.0
        %938 = vmatprep.subr.mxu0 0.0
        %939 = vmatpush1.xpose.msra.mxu0 0.0
        %940 = vmatprep.subr.mxu0 0.0
        %941 = vmatpush1.xpose.msra.mxu0 0.0
        %942 = vmatprep.subr.mxu0 0.0
        %943 = vmatpush1.xpose.msra.mxu0 %v910
        %944 = vmatprep.subr.mxu0 0.0
        %945 = vmatpush2.xpose.msra.mxu0 0.0
        %946 = vmatprep.subr.mxu0 0.0
        %947 = vmatpush2.xpose.msra.mxu0 0.0
        %948 = vmatprep.subr.mxu0 0.0
        %949 = vmatpush2.xpose.msra.mxu0 0.0
        %950 = vmatprep.subr.mxu0 0.0
        %951 = vmatpush2.xpose.msra.mxu0 0.0
        %952 = vmatprep.subr.mxu0 0.0
        %953 = vmatpush2.xpose.msra.mxu0 0.0
        %954 = vmatprep.subr.mxu0 0.0
        %955 = vmatpush2.xpose.msra.mxu0 0.0
        %956 = vmatprep.subr.mxu0 0.0
        %957 = vmatpush2.xpose.msra.mxu0 0.0
        %958 = vmatprep.subr.mxu0 0.0
        %959 = vmatpush2.xpose.msra.mxu0 0.0
        %960 = vmatprep.subr.mxu0 0.0
        %961 = vmatpush2.xpose.msra.mxu0 0.0
        %962 = vmatprep.subr.mxu0 0.0
        %963 = vmatpush2.xpose.msra.mxu0 0.0
        %964 = vmatprep.subr.mxu0 0.0
        %965 = vmatpush2.xpose.msra.mxu0 0.0
        %966 = vmatprep.subr.mxu0 0.0
        %967 = vmatpush2.xpose.msra.mxu0 0.0
        %968 = vmatprep.subr.mxu0 0.0
        %969 = vmatpush2.xpose.msra.mxu0 0.0
        %970 = vmatprep.subr.mxu0 0.0
        %971 = vmatpush2.xpose.msra.mxu0 0.0
        %972 = vmatprep.subr.mxu0 0.0
        %973 = vmatpush2.xpose.msra.mxu0 0.0
        %974 = vmatprep.subr.mxu0 0.0
        %975 = vmatpush2.xpose.msra.mxu0 0.0
        %976 = vmatprep.mubr.f32.mxu0 0.0
        %977 = vmatmul.mubr.f32.gmra.mxu0 %v908
        %v978 = vpop.f32.mrf.mxu0
        %v979 = vadd.f32 0.0, %v978
        %v980 = vpop.f32.mrf.mxu0
        %981 = vdwg.mxu0
        %v982 = vsel %vm818, %v979, -inf
        %983 = vmax.xlane.f32.xlu0 %v982
        %v984 = vpop.xlane.xlu0 %983
        %v985 = vsub.f32 %v979, %v984
        %v986 = vmul.f32 %v985, 1.442695
        %v987 = vpow.pop %v986
        %v988 = vsel %vm818, %v987, 0.0
        %989 = vadd.xlane.f32.xlu0 %v988
        %v990 = vpop.xlane.xlu0 %989
        %v991 = vrcp.pop %v990
        %v992 = vmul.f32 %v987, %v991
        %994 = vrot.lane.b32.xlu0 %v738, 112
        %v995 = vpop.permute.xlu0 %994
        %v998 = vsel %vm818, %v992, 0
        %1000 = vmatprep.subr.mxu0 0.0
        %1001 = vmatpush1.msra.mxu0 0.0
        %1002 = vmatprep.subr.mxu0 0.0
        %1003 = vmatpush1.msra.mxu0 0.0
        %1004 = vmatprep.subr.mxu0 0.0
        %1005 = vmatpush1.msra.mxu0 0.0
        %1006 = vmatprep.subr.mxu0 0.0
        %1007 = vmatpush1.msra.mxu0 0.0
        %1008 = vmatprep.subr.mxu0 0.0
        %1009 = vmatpush1.msra.mxu0 0.0
        %1010 = vmatprep.subr.mxu0 0.0
        %1011 = vmatpush1.msra.mxu0 0.0
        %1012 = vmatprep.subr.mxu0 0.0
        %1013 = vmatpush1.msra.mxu0 0.0
        %1014 = vmatprep.subr.mxu0 0.0
        %1015 = vmatpush1.msra.mxu0 0.0
        %1016 = vmatprep.subr.mxu0 0.0
        %1017 = vmatpush1.msra.mxu0 0.0
        %1018 = vmatprep.subr.mxu0 0.0
        %1019 = vmatpush1.msra.mxu0 0.0
        %1020 = vmatprep.subr.mxu0 0.0
        %1021 = vmatpush1.msra.mxu0 0.0
        %1022 = vmatprep.subr.mxu0 0.0
        %1023 = vmatpush1.msra.mxu0 0.0
        %1024 = vmatprep.subr.mxu0 0.0
        %1025 = vmatpush1.msra.mxu0 0.0
        %1026 = vmatprep.subr.mxu0 0.0
        %1027 = vmatpush1.msra.mxu0 0.0
        %1028 = vmatprep.subr.mxu0 0.0
        %1029 = vmatpush1.msra.mxu0 0.0
        %1030 = vmatprep.subr.mxu0 0.0
        %1031 = vmatpush1.msra.mxu0 %v995
        %1032 = vmatprep.subr.mxu0 0.0
        %1033 = vmatpush2.msra.mxu0 0.0
        %1034 = vmatprep.subr.mxu0 0.0
        %1035 = vmatpush2.msra.mxu0 0.0
        %1036 = vmatprep.subr.mxu0 0.0
        %1037 = vmatpush2.msra.mxu0 0.0
        %1038 = vmatprep.subr.mxu0 0.0
        %1039 = vmatpush2.msra.mxu0 0.0
        %1040 = vmatprep.subr.mxu0 0.0
        %1041 = vmatpush2.msra.mxu0 0.0
        %1042 = vmatprep.subr.mxu0 0.0
        %1043 = vmatpush2.msra.mxu0 0.0
        %1044 = vmatprep.subr.mxu0 0.0
        %1045 = vmatpush2.msra.mxu0 0.0
        %1046 = vmatprep.subr.mxu0 0.0
        %1047 = vmatpush2.msra.mxu0 0.0
        %1048 = vmatprep.subr.mxu0 0.0
        %1049 = vmatpush2.msra.mxu0 0.0
        %1050 = vmatprep.subr.mxu0 0.0
        %1051 = vmatpush2.msra.mxu0 0.0
        %1052 = vmatprep.subr.mxu0 0.0
        %1053 = vmatpush2.msra.mxu0 0.0
        %1054 = vmatprep.subr.mxu0 0.0
        %1055 = vmatpush2.msra.mxu0 0.0
        %1056 = vmatprep.subr.mxu0 0.0
        %1057 = vmatpush2.msra.mxu0 0.0
        %1058 = vmatprep.subr.mxu0 0.0
        %1059 = vmatpush2.msra.mxu0 0.0
        %1060 = vmatprep.subr.mxu0 0.0
        %1061 = vmatpush2.msra.mxu0 0.0
        %1062 = vmatprep.subr.mxu0 0.0
        %1063 = vmatpush2.msra.mxu0 0.0
        %1064 = vmatprep.mubr.f32.mxu0 0.0
        %1065 = vmatmul.mubr.f32.gmra.mxu0 %v998
        %v1066 = vpop.f32.mrf.mxu0
        %v1067 = vadd.f32 0.0, %v1066
        %v1068 = vpop.f32.mrf.mxu0
        %1069 = vdwg.mxu0
        %1071 = vrot.lane.b32.xlu0 %v1067, 16
        %v1072 = vpop.permute.xlu0 %1071
        %vm1074 = vcmask 261248
        %1075 = vst.msk [vmem:[#allocation2] sm:$0xff] %vm1074, %v1072
        %1076 = vrot.lane.b32.xlu0 %v584, 96
        %v1077 = vpop.permute.xlu0 %1076
        %1078 = vrot.lane.b32.xlu0 %v661, 96
        %v1079 = vpop.permute.xlu0 %1078
        %v1080 = vsel %vm741, %v1077, 0
        %v1082 = vsel %vm741, %v1079, 0
        %1084 = vmatprep.subr.mxu0 0.0
        %1085 = vmatpush1.xpose.msra.mxu0 0.0
        %1086 = vmatprep.subr.mxu0 0.0
        %1087 = vmatpush1.xpose.msra.mxu0 0.0
        %1088 = vmatprep.subr.mxu0 0.0
        %1089 = vmatpush1.xpose.msra.mxu0 0.0
        %1090 = vmatprep.subr.mxu0 0.0
        %1091 = vmatpush1.xpose.msra.mxu0 0.0
        %1092 = vmatprep.subr.mxu0 0.0
        %1093 = vmatpush1.xpose.msra.mxu0 0.0
        %1094 = vmatprep.subr.mxu0 0.0
        %1095 = vmatpush1.xpose.msra.mxu0 0.0
        %1096 = vmatprep.subr.mxu0 0.0
        %1097 = vmatpush1.xpose.msra.mxu0 0.0
        %1098 = vmatprep.subr.mxu0 0.0
        %1099 = vmatpush1.xpose.msra.mxu0 0.0
        %1100 = vmatprep.subr.mxu0 0.0
        %1101 = vmatpush1.xpose.msra.mxu0 0.0
        %1102 = vmatprep.subr.mxu0 0.0
        %1103 = vmatpush1.xpose.msra.mxu0 0.0
        %1104 = vmatprep.subr.mxu0 0.0
        %1105 = vmatpush1.xpose.msra.mxu0 0.0
        %1106 = vmatprep.subr.mxu0 0.0
        %1107 = vmatpush1.xpose.msra.mxu0 0.0
        %1108 = vmatprep.subr.mxu0 0.0
        %1109 = vmatpush1.xpose.msra.mxu0 0.0
        %1110 = vmatprep.subr.mxu0 0.0
        %1111 = vmatpush1.xpose.msra.mxu0 0.0
        %1112 = vmatprep.subr.mxu0 0.0
        %1113 = vmatpush1.xpose.msra.mxu0 0.0
        %1114 = vmatprep.subr.mxu0 0.0
        %1115 = vmatpush1.xpose.msra.mxu0 %v1082
        %1116 = vmatprep.subr.mxu0 0.0
        %1117 = vmatpush2.xpose.msra.mxu0 0.0
        %1118 = vmatprep.subr.mxu0 0.0
        %1119 = vmatpush2.xpose.msra.mxu0 0.0
        %1120 = vmatprep.subr.mxu0 0.0
        %1121 = vmatpush2.xpose.msra.mxu0 0.0
        %1122 = vmatprep.subr.mxu0 0.0
        %1123 = vmatpush2.xpose.msra.mxu0 0.0
        %1124 = vmatprep.subr.mxu0 0.0
        %1125 = vmatpush2.xpose.msra.mxu0 0.0
        %1126 = vmatprep.subr.mxu0 0.0
        %1127 = vmatpush2.xpose.msra.mxu0 0.0
        %1128 = vmatprep.subr.mxu0 0.0
        %1129 = vmatpush2.xpose.msra.mxu0 0.0
        %1130 = vmatprep.subr.mxu0 0.0
        %1131 = vmatpush2.xpose.msra.mxu0 0.0
        %1132 = vmatprep.subr.mxu0 0.0
        %1133 = vmatpush2.xpose.msra.mxu0 0.0
        %1134 = vmatprep.subr.mxu0 0.0
        %1135 = vmatpush2.xpose.msra.mxu0 0.0
        %1136 = vmatprep.subr.mxu0 0.0
        %1137 = vmatpush2.xpose.msra.mxu0 0.0
        %1138 = vmatprep.subr.mxu0 0.0
        %1139 = vmatpush2.xpose.msra.mxu0 0.0
        %1140 = vmatprep.subr.mxu0 0.0
        %1141 = vmatpush2.xpose.msra.mxu0 0.0
        %1142 = vmatprep.subr.mxu0 0.0
        %1143 = vmatpush2.xpose.msra.mxu0 0.0
        %1144 = vmatprep.subr.mxu0 0.0
        %1145 = vmatpush2.xpose.msra.mxu0 0.0
        %1146 = vmatprep.subr.mxu0 0.0
        %1147 = vmatpush2.xpose.msra.mxu0 0.0
        %1148 = vmatprep.mubr.f32.mxu0 0.0
        %1149 = vmatmul.mubr.f32.gmra.mxu0 %v1080
        %v1150 = vpop.f32.mrf.mxu0
        %v1151 = vadd.f32 0.0, %v1150
        %v1152 = vpop.f32.mrf.mxu0
        %1153 = vdwg.mxu0
        %v1154 = vsel %vm818, %v1151, -inf
        %1155 = vmax.xlane.f32.xlu0 %v1154
        %v1156 = vpop.xlane.xlu0 %1155
        %v1157 = vsub.f32 %v1151, %v1156
        %v1158 = vmul.f32 %v1157, 1.442695
        %v1159 = vpow.pop %v1158
        %v1160 = vsel %vm818, %v1159, 0.0
        %1161 = vadd.xlane.f32.xlu0 %v1160
        %v1162 = vpop.xlane.xlu0 %1161
        %v1163 = vrcp.pop %v1162
        %v1164 = vmul.f32 %v1159, %v1163
        %1165 = vrot.lane.b32.xlu0 %v738, 96
        %v1166 = vpop.permute.xlu0 %1165
        %v1169 = vsel %vm818, %v1164, 0
        %1171 = vmatprep.subr.mxu0 0.0
        %1172 = vmatpush1.msra.mxu0 0.0
        %1173 = vmatprep.subr.mxu0 0.0
        %1174 = vmatpush1.msra.mxu0 0.0
        %1175 = vmatprep.subr.mxu0 0.0
        %1176 = vmatpush1.msra.mxu0 0.0
        %1177 = vmatprep.subr.mxu0 0.0
        %1178 = vmatpush1.msra.mxu0 0.0
        %1179 = vmatprep.subr.mxu0 0.0
        %1180 = vmatpush1.msra.mxu0 0.0
        %1181 = vmatprep.subr.mxu0 0.0
        %1182 = vmatpush1.msra.mxu0 0.0
        %1183 = vmatprep.subr.mxu0 0.0
        %1184 = vmatpush1.msra.mxu0 0.0
        %1185 = vmatprep.subr.mxu0 0.0
        %1186 = vmatpush1.msra.mxu0 0.0
        %1187 = vmatprep.subr.mxu0 0.0
        %1188 = vmatpush1.msra.mxu0 0.0
        %1189 = vmatprep.subr.mxu0 0.0
        %1190 = vmatpush1.msra.mxu0 0.0
        %1191 = vmatprep.subr.mxu0 0.0
        %1192 = vmatpush1.msra.mxu0 0.0
        %1193 = vmatprep.subr.mxu0 0.0
        %1194 = vmatpush1.msra.mxu0 0.0
        %1195 = vmatprep.subr.mxu0 0.0
        %1196 = vmatpush1.msra.mxu0 0.0
        %1197 = vmatprep.subr.mxu0 0.0
        %1198 = vmatpush1.msra.mxu0 0.0
        %1199 = vmatprep.subr.mxu0 0.0
        %1200 = vmatpush1.msra.mxu0 0.0
        %1201 = vmatprep.subr.mxu0 0.0
        %1202 = vmatpush1.msra.mxu0 %v1166
        %1203 = vmatprep.subr.mxu0 0.0
        %1204 = vmatpush2.msra.mxu0 0.0
        %1205 = vmatprep.subr.mxu0 0.0
        %1206 = vmatpush2.msra.mxu0 0.0
        %1207 = vmatprep.subr.mxu0 0.0
        %1208 = vmatpush2.msra.mxu0 0.0
        %1209 = vmatprep.subr.mxu0 0.0
        %1210 = vmatpush2.msra.mxu0 0.0
        %1211 = vmatprep.subr.mxu0 0.0
        %1212 = vmatpush2.msra.mxu0 0.0
        %1213 = vmatprep.subr.mxu0 0.0
        %1214 = vmatpush2.msra.mxu0 0.0
        %1215 = vmatprep.subr.mxu0 0.0
        %1216 = vmatpush2.msra.mxu0 0.0
        %1217 = vmatprep.subr.mxu0 0.0
        %1218 = vmatpush2.msra.mxu0 0.0
        %1219 = vmatprep.subr.mxu0 0.0
        %1220 = vmatpush2.msra.mxu0 0.0
        %1221 = vmatprep.subr.mxu0 0.0
        %1222 = vmatpush2.msra.mxu0 0.0
        %1223 = vmatprep.subr.mxu0 0.0
        %1224 = vmatpush2.msra.mxu0 0.0
        %1225 = vmatprep.subr.mxu0 0.0
        %1226 = vmatpush2.msra.mxu0 0.0
        %1227 = vmatprep.subr.mxu0 0.0
        %1228 = vmatpush2.msra.mxu0 0.0
        %1229 = vmatprep.subr.mxu0 0.0
        %1230 = vmatpush2.msra.mxu0 0.0
        %1231 = vmatprep.subr.mxu0 0.0
        %1232 = vmatpush2.msra.mxu0 0.0
        %1233 = vmatprep.subr.mxu0 0.0
        %1234 = vmatpush2.msra.mxu0 0.0
        %1235 = vmatprep.mubr.f32.mxu0 0.0
        %1236 = vmatmul.mubr.f32.gmra.mxu0 %v1169
        %v1237 = vpop.f32.mrf.mxu0
        %v1238 = vadd.f32 0.0, %v1237
        %v1239 = vpop.f32.mrf.mxu0
        %1240 = vdwg.mxu0
        %1242 = vrot.lane.b32.xlu0 %v1238, 32
        %v1243 = vpop.permute.xlu0 %1242
        %vm1245 = vcmask 392448
        %1246 = vst.msk [vmem:[#allocation2] sm:$0xff] %vm1245, %v1243
        %1247 = vrot.lane.b32.xlu0 %v584, 80
        %v1248 = vpop.permute.xlu0 %1247
        %1249 = vrot.lane.b32.xlu0 %v661, 80
        %v1250 = vpop.permute.xlu0 %1249
        %v1251 = vsel %vm741, %v1248, 0
        %v1253 = vsel %vm741, %v1250, 0
        %1255 = vmatprep.subr.mxu0 0.0
        %1256 = vmatpush1.xpose.msra.mxu0 0.0
        %1257 = vmatprep.subr.mxu0 0.0
        %1258 = vmatpush1.xpose.msra.mxu0 0.0
        %1259 = vmatprep.subr.mxu0 0.0
        %1260 = vmatpush1.xpose.msra.mxu0 0.0
        %1261 = vmatprep.subr.mxu0 0.0
        %1262 = vmatpush1.xpose.msra.mxu0 0.0
        %1263 = vmatprep.subr.mxu0 0.0
        %1264 = vmatpush1.xpose.msra.mxu0 0.0
        %1265 = vmatprep.subr.mxu0 0.0
        %1266 = vmatpush1.xpose.msra.mxu0 0.0
        %1267 = vmatprep.subr.mxu0 0.0
        %1268 = vmatpush1.xpose.msra.mxu0 0.0
        %1269 = vmatprep.subr.mxu0 0.0
        %1270 = vmatpush1.xpose.msra.mxu0 0.0
        %1271 = vmatprep.subr.mxu0 0.0
        %1272 = vmatpush1.xpose.msra.mxu0 0.0
        %1273 = vmatprep.subr.mxu0 0.0
        %1274 = vmatpush1.xpose.msra.mxu0 0.0
        %1275 = vmatprep.subr.mxu0 0.0
        %1276 = vmatpush1.xpose.msra.mxu0 0.0
        %1277 = vmatprep.subr.mxu0 0.0
        %1278 = vmatpush1.xpose.msra.mxu0 0.0
        %1279 = vmatprep.subr.mxu0 0.0
        %1280 = vmatpush1.xpose.msra.mxu0 0.0
        %1281 = vmatprep.subr.mxu0 0.0
        %1282 = vmatpush1.xpose.msra.mxu0 0.0
        %1283 = vmatprep.subr.mxu0 0.0
        %1284 = vmatpush1.xpose.msra.mxu0 0.0
        %1285 = vmatprep.subr.mxu0 0.0
        %1286 = vmatpush1.xpose.msra.mxu0 %v1253
        %1287 = vmatprep.subr.mxu0 0.0
        %1288 = vmatpush2.xpose.msra.mxu0 0.0
        %1289 = vmatprep.subr.mxu0 0.0
        %1290 = vmatpush2.xpose.msra.mxu0 0.0
        %1291 = vmatprep.subr.mxu0 0.0
        %1292 = vmatpush2.xpose.msra.mxu0 0.0
        %1293 = vmatprep.subr.mxu0 0.0
        %1294 = vmatpush2.xpose.msra.mxu0 0.0
        %1295 = vmatprep.subr.mxu0 0.0
        %1296 = vmatpush2.xpose.msra.mxu0 0.0
        %1297 = vmatprep.subr.mxu0 0.0
        %1298 = vmatpush2.xpose.msra.mxu0 0.0
        %1299 = vmatprep.subr.mxu0 0.0
        %1300 = vmatpush2.xpose.msra.mxu0 0.0
        %1301 = vmatprep.subr.mxu0 0.0
        %1302 = vmatpush2.xpose.msra.mxu0 0.0
        %1303 = vmatprep.subr.mxu0 0.0
        %1304 = vmatpush2.xpose.msra.mxu0 0.0
        %1305 = vmatprep.subr.mxu0 0.0
        %1306 = vmatpush2.xpose.msra.mxu0 0.0
        %1307 = vmatprep.subr.mxu0 0.0
        %1308 = vmatpush2.xpose.msra.mxu0 0.0
        %1309 = vmatprep.subr.mxu0 0.0
        %1310 = vmatpush2.xpose.msra.mxu0 0.0
        %1311 = vmatprep.subr.mxu0 0.0
        %1312 = vmatpush2.xpose.msra.mxu0 0.0
        %1313 = vmatprep.subr.mxu0 0.0
        %1314 = vmatpush2.xpose.msra.mxu0 0.0
        %1315 = vmatprep.subr.mxu0 0.0
        %1316 = vmatpush2.xpose.msra.mxu0 0.0
        %1317 = vmatprep.subr.mxu0 0.0
        %1318 = vmatpush2.xpose.msra.mxu0 0.0
        %1319 = vmatprep.mubr.f32.mxu0 0.0
        %1320 = vmatmul.mubr.f32.gmra.mxu0 %v1251
        %v1321 = vpop.f32.mrf.mxu0
        %v1322 = vadd.f32 0.0, %v1321
        %v1323 = vpop.f32.mrf.mxu0
        %1324 = vdwg.mxu0
        %v1325 = vsel %vm818, %v1322, -inf
        %1326 = vmax.xlane.f32.xlu0 %v1325
        %v1327 = vpop.xlane.xlu0 %1326
        %v1328 = vsub.f32 %v1322, %v1327
        %v1329 = vmul.f32 %v1328, 1.442695
        %v1330 = vpow.pop %v1329
        %v1331 = vsel %vm818, %v1330, 0.0
        %1332 = vadd.xlane.f32.xlu0 %v1331
        %v1333 = vpop.xlane.xlu0 %1332
        %v1334 = vrcp.pop %v1333
        %v1335 = vmul.f32 %v1330, %v1334
        %1336 = vrot.lane.b32.xlu0 %v738, 80
        %v1337 = vpop.permute.xlu0 %1336
        %v1340 = vsel %vm818, %v1335, 0
        %1342 = vmatprep.subr.mxu0 0.0
        %1343 = vmatpush1.msra.mxu0 0.0
        %1344 = vmatprep.subr.mxu0 0.0
        %1345 = vmatpush1.msra.mxu0 0.0
        %1346 = vmatprep.subr.mxu0 0.0
        %1347 = vmatpush1.msra.mxu0 0.0
        %1348 = vmatprep.subr.mxu0 0.0
        %1349 = vmatpush1.msra.mxu0 0.0
        %1350 = vmatprep.subr.mxu0 0.0
        %1351 = vmatpush1.msra.mxu0 0.0
        %1352 = vmatprep.subr.mxu0 0.0
        %1353 = vmatpush1.msra.mxu0 0.0
        %1354 = vmatprep.subr.mxu0 0.0
        %1355 = vmatpush1.msra.mxu0 0.0
        %1356 = vmatprep.subr.mxu0 0.0
        %1357 = vmatpush1.msra.mxu0 0.0
        %1358 = vmatprep.subr.mxu0 0.0
        %1359 = vmatpush1.msra.mxu0 0.0
        %1360 = vmatprep.subr.mxu0 0.0
        %1361 = vmatpush1.msra.mxu0 0.0
        %1362 = vmatprep.subr.mxu0 0.0
        %1363 = vmatpush1.msra.mxu0 0.0
        %1364 = vmatprep.subr.mxu0 0.0
        %1365 = vmatpush1.msra.mxu0 0.0
        %1366 = vmatprep.subr.mxu0 0.0
        %1367 = vmatpush1.msra.mxu0 0.0
        %1368 = vmatprep.subr.mxu0 0.0
        %1369 = vmatpush1.msra.mxu0 0.0
        %1370 = vmatprep.subr.mxu0 0.0
        %1371 = vmatpush1.msra.mxu0 0.0
        %1372 = vmatprep.subr.mxu0 0.0
        %1373 = vmatpush1.msra.mxu0 %v1337
        %1374 = vmatprep.subr.mxu0 0.0
        %1375 = vmatpush2.msra.mxu0 0.0
        %1376 = vmatprep.subr.mxu0 0.0
        %1377 = vmatpush2.msra.mxu0 0.0
        %1378 = vmatprep.subr.mxu0 0.0
        %1379 = vmatpush2.msra.mxu0 0.0
        %1380 = vmatprep.subr.mxu0 0.0
        %1381 = vmatpush2.msra.mxu0 0.0
        %1382 = vmatprep.subr.mxu0 0.0
        %1383 = vmatpush2.msra.mxu0 0.0
        %1384 = vmatprep.subr.mxu0 0.0
        %1385 = vmatpush2.msra.mxu0 0.0
        %1386 = vmatprep.subr.mxu0 0.0
        %1387 = vmatpush2.msra.mxu0 0.0
        %1388 = vmatprep.subr.mxu0 0.0
        %1389 = vmatpush2.msra.mxu0 0.0
        %1390 = vmatprep.subr.mxu0 0.0
        %1391 = vmatpush2.msra.mxu0 0.0
        %1392 = vmatprep.subr.mxu0 0.0
        %1393 = vmatpush2.msra.mxu0 0.0
        %1394 = vmatprep.subr.mxu0 0.0
        %1395 = vmatpush2.msra.mxu0 0.0
        %1396 = vmatprep.subr.mxu0 0.0
        %1397 = vmatpush2.msra.mxu0 0.0
        %1398 = vmatprep.subr.mxu0 0.0
        %1399 = vmatpush2.msra.mxu0 0.0
        %1400 = vmatprep.subr.mxu0 0.0
        %1401 = vmatpush2.msra.mxu0 0.0
        %1402 = vmatprep.subr.mxu0 0.0
        %1403 = vmatpush2.msra.mxu0 0.0
        %1404 = vmatprep.subr.mxu0 0.0
        %1405 = vmatpush2.msra.mxu0 0.0
        %1406 = vmatprep.mubr.f32.mxu0 0.0
        %1407 = vmatmul.mubr.f32.gmra.mxu0 %v1340
        %v1408 = vpop.f32.mrf.mxu0
        %v1409 = vadd.f32 0.0, %v1408
        %v1410 = vpop.f32.mrf.mxu0
        %1411 = vdwg.mxu0
        %1413 = vrot.lane.b32.xlu0 %v1409, 48
        %v1414 = vpop.permute.xlu0 %1413
        %vm1416 = vcmask 523648
        %1417 = vst.msk [vmem:[#allocation2] sm:$0xff] %vm1416, %v1414
        %v1418 = vld [vmem:[#allocation2] sm:$0xff]
        %v1419 = vld [vmem:[%s8] sm:$0xff]
        %v1420 = vld [vmem:[%s8 + $0x8] sm:$0xff]
        %v1421 = vld [vmem:[%s8 + $0x10] sm:$0xff]
        %v1422 = vld [vmem:[%s8 + $0x18] sm:$0xff]
        %v1423 = vld [vmem:[%s8 + $0x20] sm:$0xff]
        %v1424 = vld [vmem:[%s8 + $0x28] sm:$0xff]
        %v1425 = vld [vmem:[%s8 + $0x30] sm:$0xff]
        %v1426 = vld [vmem:[%s8 + $0x38] sm:$0xff]
        %v1427 = vld [vmem:[%s9] sm:$0x1]
        %v1429 = vlaneseq
        %v1430 = vshrl.u32 %v1429, 7
        %v1431 = vsub.s32 0, %v1430
        %v1432 = vrot.slane %v1427, %v1431
        %vm1434 = vcmask 523264
        %v1436 = vsel %vm1434, %v1418, 0
        %1438 = vmatprep.subr.mxu0 0.0
        %1439 = vmatpush1.msra.mxu0 0.0
        %1440 = vmatprep.subr.mxu0 0.0
        %1441 = vmatpush1.msra.mxu0 0.0
        %1442 = vmatprep.subr.mxu0 0.0
        %1443 = vmatpush1.msra.mxu0 0.0
        %1444 = vmatprep.subr.mxu0 0.0
        %1445 = vmatpush1.msra.mxu0 0.0
        %1446 = vmatprep.subr.mxu0 0.0
        %1447 = vmatpush1.msra.mxu0 0.0
        %1448 = vmatprep.subr.mxu0 0.0
        %1449 = vmatpush1.msra.mxu0 0.0
        %1450 = vmatprep.subr.mxu0 0.0
        %1451 = vmatpush1.msra.mxu0 0.0
        %1452 = vmatprep.subr.mxu0 0.0
        %1453 = vmatpush1.msra.mxu0 0.0
        %1454 = vmatprep.subr.mxu0 0.0
        %1455 = vmatpush1.msra.mxu0 %v1426
        %1456 = vmatprep.subr.mxu0 0.0
        %1457 = vmatpush1.msra.mxu0 %v1425
        %1458 = vmatprep.subr.mxu0 0.0
        %1459 = vmatpush1.msra.mxu0 %v1424
        %1460 = vmatprep.subr.mxu0 0.0
        %1461 = vmatpush1.msra.mxu0 %v1423
        %1462 = vmatprep.subr.mxu0 0.0
        %1463 = vmatpush1.msra.mxu0 %v1422
        %1464 = vmatprep.subr.mxu0 0.0
        %1465 = vmatpush1.msra.mxu0 %v1421
        %1466 = vmatprep.subr.mxu0 0.0
        %1467 = vmatpush1.msra.mxu0 %v1420
        %1468 = vmatprep.subr.mxu0 0.0
        %1469 = vmatpush1.msra.mxu0 %v1419
        %1470 = vmatprep.subr.mxu0 0.0
        %1471 = vmatpush2.msra.mxu0 0.0
        %1472 = vmatprep.subr.mxu0 0.0
        %1473 = vmatpush2.msra.mxu0 0.0
        %1474 = vmatprep.subr.mxu0 0.0
        %1475 = vmatpush2.msra.mxu0 0.0
        %1476 = vmatprep.subr.mxu0 0.0
        %1477 = vmatpush2.msra.mxu0 0.0
        %1478 = vmatprep.subr.mxu0 0.0
        %1479 = vmatpush2.msra.mxu0 0.0
        %1480 = vmatprep.subr.mxu0 0.0
        %1481 = vmatpush2.msra.mxu0 0.0
        %1482 = vmatprep.subr.mxu0 0.0
        %1483 = vmatpush2.msra.mxu0 0.0
        %1484 = vmatprep.subr.mxu0 0.0
        %1485 = vmatpush2.msra.mxu0 0.0
        %1486 = vmatprep.subr.mxu0 0.0
        %1487 = vmatpush2.msra.mxu0 0.0
        %1488 = vmatprep.subr.mxu0 0.0
        %1489 = vmatpush2.msra.mxu0 0.0
        %1490 = vmatprep.subr.mxu0 0.0
        %1491 = vmatpush2.msra.mxu0 0.0
        %1492 = vmatprep.subr.mxu0 0.0
        %1493 = vmatpush2.msra.mxu0 0.0
        %1494 = vmatprep.subr.mxu0 0.0
        %1495 = vmatpush2.msra.mxu0 0.0
        %1496 = vmatprep.subr.mxu0 0.0
        %1497 = vmatpush2.msra.mxu0 0.0
        %1498 = vmatprep.subr.mxu0 0.0
        %1499 = vmatpush2.msra.mxu0 0.0
        %1500 = vmatprep.subr.mxu0 0.0
        %1501 = vmatpush2.msra.mxu0 0.0
        %1502 = vmatprep.mubr.f32.mxu0 0.0
        %1503 = vmatmul.mubr.f32.gmra.mxu0 %v1436
        %v1504 = vpop.f32.mrf.mxu0
        %v1505 = vadd.f32 %v1432, %v1504
        %v1506 = vpop.f32.mrf.mxu0
        %1507 = vdwg.mxu0
        %1508 = vst.msk [vmem:[%s445] sm:$0xff] %vm449, %v1505
        %s1509 = sand.u32 %s263, 1
        %s1510 = scalar_lea.sflag [#allocation5], %s1509
        %s1511 = sand.u32 %s263, 1
        %s1512 = smul.addr %s1511, 8
        %s1513 = scalar_lea.vmem [#allocation9], %s1512
        // Predicated region
        $region73: #{tpu_custom_call.1} parent=59 // pred_check
          %p1514 = pneg %p273
        $region74: #{tpu_custom_call.1} parent=59 // pred_check_branch
          %1516 = sbr.rel (%p1514) target = $region76
        $region75: #{tpu_custom_call.1} parent=59 // pred_region
          %s1518 = ssub.s32 128, 128
          %1519 = vsyncadd %s1510, %s1518
          %s1520 = smul.addr %s30, 128
          %s1521 = scalar_lea.hbm %s10, %s1520
          %s1523 = sshll.u32 %s1513, 4
          %s1524 = int_to_ptr.vmem [resolvable:$true] %s1523
          %1526 = dma.vmem_to_hbm [thread:$0]  %s1524, 128, %s1521, %s1510
        $region76: #{tpu_custom_call.1} parent=59 // pred_fallthru
          _
      $region60: #{tpu_custom_call.1} parent=5 // pred_fallthru
        _
      %p1527 = scmp.le.s32.totalorder 2, %s25
      // Predicated region
      $region77: #{tpu_custom_call.1} parent=5 // pred_check
        %p1528 = pneg %p1527
      $region78: #{tpu_custom_call.1} parent=5 // pred_check_branch
        %1530 = sbr.rel (%p1528) target = $region80
      $region79: #{tpu_custom_call.1} parent=5 // pred_region
        %s1531 = ssub.s32 %s25, 2
        // Predicated region
        $region81: #{tpu_custom_call.1} parent=79 // pred_check
          %p1532 = pneg %p279
        $region82: #{tpu_custom_call.1} parent=79 // pred_check_branch
          %1534 = sbr.rel (%p1532) target = $region84
        $region83: #{tpu_custom_call.1} parent=79 // pred_region
          %s1535 = sand.u32 %s264, 1
          %s1536 = scalar_lea.sflag [#allocation5], %s1535
          %s1537 = sand.u32 %s264, 1
          %s1538 = smul.addr %s1537, 8
          %s1539 = scalar_lea.vmem [#allocation9], %s1538
          %1540 = dma.done %s1536, 128
        $region84: #{tpu_custom_call.1} parent=79 // pred_fallthru
          _
      $region80: #{tpu_custom_call.1} parent=5 // pred_fallthru
        _
    $region6: #{tpu_custom_call.1} parent=1 // loop_footer
      %s29 = sadd.s32 1, %s25
    $region7: #{tpu_custom_call.1} parent=1 // loop_footer_branch
      %24 = sbr.rel target = $region3
    $region8: #{tpu_custom_call.1} parent=1 // loop_exit
      _
    %1541 = vsyncpa [#allocation4], 1
    %s1542 = scalar_lea.sflag [#allocation4], 1
    %1543 = vsyncpa %s1542, 1
    %1544 = vsyncpa [#allocation7], 1
    %s1545 = scalar_lea.sflag [#allocation7], 1
    %1546 = vsyncpa %s1545, 1
    %1547 = vsyncpa [#allocation5], 1
    %s1548 = scalar_lea.sflag [#allocation5], 1
    %1549 = vsyncpa %s1548, 1

</llo_original>
